<compile_context>
chip_gen: v6e
topology: v6e:2x2x1
jax: 0.10.0
libtpu: 0.0.40
codegen_flags: <defaults>
</compile_context>

<pallas_src>
import functools

import jax
import jax.numpy as jnp
import numpy as np
from jax.experimental import pallas as pl
from jax.experimental.pallas import tpu as pltpu

NEG_SLOPE = 1.0            # nn.LeakyReLU(True) -> negative_slope = True == 1.0
BN_EPS = 1e-5
COMPUTE_DTYPE = jnp.bfloat16


def _decoder_map_kernel(x_ref, w_ref, shift_ref, o_ref, *,
                        kh, kw, width, hw, neg_slope):
    """Fused (upsampled) 3x3 conv + folded-BN epilogue for one batch element.

    x_ref:     (Cin, (H + 2*(ph+1)) * W)  bf16 row-padded, spatially-flattened input
    w_ref:     (kh*kw, Cout, Cin)         bf16 conv weights with BN scale folded in
    shift_ref: (Cout, 1)                  f32  folded conv-bias + BN shift
    o_ref:     (Cout, H*W)                f32  output (lane dim = H*W)
    """
    cout = o_ref.shape[0]
    pw = kw // 2
    # Column index within each image row, used to mask the horizontal-pad taps
    # (the flattened layout has no explicit W padding; out-of-row lanes wrap to
    # the neighbouring row and must contribute zero).
    col = jax.lax.broadcasted_iota(jnp.int32, (1, hw), 1) % width

    acc = jnp.zeros((cout, hw), jnp.float32)
    for kj in range(kw):                       # group taps by horizontal offset
        dj = kj - pw
        part = jnp.zeros((cout, hw), jnp.float32)
        for ki in range(kh):
            # Output position hw reads padded-flat index hw + (ki+1)*W + dj.
            start = (ki + 1) * width + dj
            xs = x_ref[:, start:start + hw]                  # (Cin, H*W) bf16
            part = part + jnp.dot(w_ref[ki * kw + kj], xs,
                                  preferred_element_type=jnp.float32)
        if dj < 0:                                           # left conv padding
            part = jnp.where(col >= -dj, part, 0.0)
        elif dj > 0:                                         # right conv padding
            part = jnp.where(col < width - dj, part, 0.0)
        acc = acc + part

    y = acc + shift_ref[...]       # conv bias + BatchNorm(inference), folded
    # Dropout(0.3): identity in eval mode.
    if neg_slope != 1.0:           # LeakyReLU(True) -> slope 1.0 -> identity
        y = jnp.where(y >= 0.0, y, neg_slope * y)
    o_ref[...] = y.astype(o_ref.dtype)


def decoder_map_forward(x_nchw, params, *, compute_dtype=COMPUTE_DTYPE):
    """Forward pass of DecoderMap. x_nchw: (N, Cin, H0, W0) float32 -> NCHW out."""
    w = params["conv_w"]          # (Cout, Cin, KH, KW)  -- PyTorch layout
    b = params["conv_b"]          # (Cout,)
    gamma = params["bn_gamma"]    # (Cout,)
    beta = params["bn_beta"]      # (Cout,)
    run_mean = params["bn_mean"]  # (Cout,)
    run_var = params["bn_var"]    # (Cout,)

    c_out, c_in, kh, kw = w.shape
    ph = kh // 2                  # stride=1, padding=kh//2 assumed (3x3 conv)

    # ---- glue (plain JAX, cheap): upsample + row-pad + flatten + dtype ----
    x = jnp.repeat(jnp.repeat(x_nchw, 2, axis=2), 2, axis=3)   # Interpolate(): nearest x2
    n, _, h, wd = x.shape
    hw = h * wd
    pt = ph + 1                                # row pad = conv pad + 1 row of slack
    xp = jnp.pad(x, ((0, 0), (0, 0), (pt, pt), (0, 0)))
    flat_len = (h + 2 * pt) * wd
    x_flat = xp.reshape(n, c_in, flat_len).astype(compute_dtype)

    # ---- fold BatchNorm (running stats) + conv bias into weights / shift ----
    scale = gamma / jnp.sqrt(run_var + BN_EPS)                 # (Cout,)
    shift = (b * scale + beta - run_mean * scale).astype(jnp.float32)
    shift = shift.reshape(c_out, 1)
    w_folded = w * scale[:, None, None, None]                  # (Cout,Cin,KH,KW)
    w_folded = jnp.transpose(w_folded, (2, 3, 0, 1)).reshape(kh * kw, c_out, c_in)
    w_folded = w_folded.astype(compute_dtype)

    itemsize = int(np.dtype(compute_dtype).itemsize)
    cost = pl.CostEstimate(
        flops=int(2 * n * hw * (kh * kw * c_in) * c_out),
        transcendentals=0,
        bytes_accessed=int(x_flat.size * itemsize + w_folded.size * itemsize
                           + n * c_out * hw * 4),
    )

    # ---- Pallas kernel: fused conv + epilogue, grid over batch (parallel) ----
    out_flat = pl.pallas_call(
        functools.partial(_decoder_map_kernel, kh=kh, kw=kw, width=wd, hw=hw,
                          neg_slope=NEG_SLOPE),
        out_shape=jax.ShapeDtypeStruct((n, c_out, hw), x_nchw.dtype),
        grid=(n,),
        in_specs=[
            pl.BlockSpec((None, c_in, flat_len), lambda i: (i, 0, 0)),
            pl.BlockSpec((kh * kw, c_out, c_in), lambda i: (0, 0, 0)),
            pl.BlockSpec((c_out, 1), lambda i: (0, 0)),
        ],
        out_specs=pl.BlockSpec((None, c_out, hw), lambda i: (i, 0, 0)),
        compiler_params=pltpu.CompilerParams(dimension_semantics=("parallel",)),
        cost_estimate=cost,
    )(x_flat, w_folded, shift)

    return out_flat.reshape(n, c_out, h, wd)      # already NCHW: free reshape


def _reference_forward(x_nchw, params, compute_dtype=COMPUTE_DTYPE):
    """Pure-JAX reference (lax.conv), mirroring the kernel's bf16 quantization."""
    w, b = params["conv_w"], params["conv_b"]
    gamma, beta = params["bn_gamma"], params["bn_beta"]
    mean, var = params["bn_mean"], params["bn_var"]
    kh, kw = w.shape[2], w.shape[3]
    ph, pw = kh // 2, kw // 2

    x = jnp.repeat(jnp.repeat(x_nchw, 2, axis=2), 2, axis=3)     # nearest x2
    scale = gamma / jnp.sqrt(var + BN_EPS)
    w_s = (w * scale[:, None, None, None]).astype(compute_dtype).astype(jnp.float32)
    xq = x.astype(compute_dtype).astype(jnp.float32)
    y = jax.lax.conv_general_dilated(
        xq, w_s, window_strides=(1, 1), padding=((ph, ph), (pw, pw)),
        dimension_numbers=("NCHW", "OIHW", "NCHW"))
    shift = b * scale + beta - mean * scale
    y = y + shift[None, :, None, None]
    if NEG_SLOPE != 1.0:
        y = jnp.where(y >= 0.0, y, NEG_SLOPE * y)
    return y


def make_params(key, c_in, c_out, k):
    """Deterministic synthetic parameters (shapes from trained_net.final_conv2d)."""
    k_w, k_b = jax.random.split(key)
    fan_in = c_in * k * k
    bound = 1.0 / np.sqrt(fan_in)
    return {
        "conv_w": jax.random.uniform(k_w, (c_out, c_in, k, k), jnp.float32, -bound, bound),
        "conv_b": jax.random.uniform(k_b, (c_out,), jnp.float32, -bound, bound),
        # BatchNorm2d default init (freshly constructed in DecoderMap.__init__)
        "bn_gamma": jnp.ones((c_out,), jnp.float32),
        "bn_beta": jnp.zeros((c_out,), jnp.float32),
        "bn_mean": jnp.zeros((c_out,), jnp.float32),
        "bn_var": jnp.ones((c_out,), jnp.float32),
    }


if __name__ == "__main__":
    key = jax.random.PRNGKey(0)
    k_x, k_p = jax.random.split(key)

    N, C_IN, C_OUT, H0, W0, K = 2, 4, 4, 16, 16, 3
    x = jax.random.normal(k_x, (N, C_IN, H0, W0), jnp.float32)
    params = make_params(k_p, C_IN, C_OUT, K)

    fwd = jax.jit(decoder_map_forward)
    out = jax.block_until_ready(fwd(x, params))
    ref = jax.block_until_ready(_reference_forward(x, params))

    assert out.shape == (N, C_OUT, 2 * H0, 2 * W0), out.shape
    assert np.allclose(np.asarray(out), np.asarray(ref), atol=1e-3, rtol=1e-3), (
        float(np.max(np.abs(np.asarray(out) - np.asarray(ref)))))

    print("KERNEL_OK")
</pallas_src>

<mosaic_0001>
module attributes {stable_mosaic.version = 11 : i64} {
  func.func @_decoder_map_kernel(%arg0: i32, %arg1: memref<1x4x1152xbf16, #tpu.memory_space<vmem>>, %arg2: memref<9x4x4xbf16, #tpu.memory_space<vmem>>, %arg3: memref<4x1xf32, #tpu.memory_space<vmem>>, %arg4: memref<1x4x1024xf32, #tpu.memory_space<vmem>>) attributes {dimension_semantics = [#tpu.dimension_semantics<parallel>], iteration_bounds = array<i64: 2>, scalar_prefetch = 0 : i64, scratch_operands = 0 : i64, tpu.core_type = #tpu.core_type<tc>, window_params = [{transform_indices = @transform_0, window_bounds = array<i64: 1, 4, 1152>}, {pipeline_mode = #tpu.pipeline_mode<synchronous>, transform_indices = @transform_1, window_bounds = array<i64: 9, 4, 4>}, {pipeline_mode = #tpu.pipeline_mode<synchronous>, transform_indices = @transform_2, window_bounds = array<i64: 4, 1>}, {transform_indices = @transform_3, window_bounds = array<i64: 1, 4, 1024>}]} {
    %0 = tpu.iota {dimensions = array<i32: 1>} : vector<1x1024xi32>
    %c32_i32 = arith.constant 32 : i32
    %c0_i32 = arith.constant 0 : i32
    %1 = arith.cmpi eq, %c32_i32, %c0_i32 : i32
    %c1_i32 = arith.constant 1 : i32
    %2 = arith.select %1, %c1_i32, %c32_i32 : i32
    %3 = vector.broadcast %2 : i32 to vector<1x1024xi32>
    %4 = arith.remsi %0, %3 : vector<1x1024xi32>
    %c0_i32_0 = arith.constant 0 : i32
    %5 = vector.broadcast %c0_i32_0 : i32 to vector<1x1024xi32>
    %6 = arith.cmpi ne, %4, %5 : vector<1x1024xi32>
    %c0_i32_1 = arith.constant 0 : i32
    %7 = vector.broadcast %c0_i32_1 : i32 to vector<1x1024xi32>
    %8 = arith.cmpi slt, %4, %7 : vector<1x1024xi32>
    %c0_i32_2 = arith.constant 0 : i32
    %9 = arith.cmpi slt, %2, %c0_i32_2 : i32
    %10 = vector.broadcast %9 : i1 to vector<1x1024xi1>
    %11 = vector.broadcast %10 : vector<1x1024xi1> to vector<1x1024xi1>
    %12 = arith.xori %8, %11 : vector<1x1024xi1>
    %13 = arith.andi %12, %6 : vector<1x1024xi1>
    %14 = vector.broadcast %2 : i32 to vector<1x1024xi32>
    %15 = arith.addi %4, %14 : vector<1x1024xi32>
    %16 = arith.select %13, %15, %4 : vector<1x1024xi1>, vector<1x1024xi32>
    %cst = arith.constant 0.000000e+00 : f32
    %17 = vector.broadcast %cst : f32 to vector<4x1024xf32>
    %cst_3 = arith.constant 0.000000e+00 : f32
    %18 = vector.broadcast %cst_3 : f32 to vector<4x1024xf32>
    %c0 = arith.constant 0 : index
    %c0_4 = arith.constant 0 : index
    %c31 = arith.constant 31 : index
    %19 = vector.load %arg1[%c0, %c0_4, %c31] : memref<1x4x1152xbf16, #tpu.memory_space<vmem>>, vector<1x4x1024xbf16>
    %20 = vector.shape_cast %19 : vector<1x4x1024xbf16> to vector<4x1024xbf16>
    %c0_5 = arith.constant 0 : index
    %c0_6 = arith.constant 0 : index
    %c0_7 = arith.constant 0 : index
    %21 = vector.load %arg2[%c0_5, %c0_6, %c0_7] : memref<9x4x4xbf16, #tpu.memory_space<vmem>>, vector<1x4x4xbf16>
    %22 = vector.shape_cast %21 : vector<1x4x4xbf16> to vector<4x4xbf16>
    %cst_8 = arith.constant dense<0.000000e+00> : vector<4x1024xf32>
    %23 = tpu.matmul %22, %20, %cst_8 {dimension_numbers = #tpu.dot_dimension_numbers<[1], [0], [0], [1], [0, 0, 1, 1], [], []>} : vector<4x4xbf16>, vector<4x1024xbf16>, vector<4x1024xf32> -> vector<4x1024xf32>
    %24 = arith.addf %18, %23 : vector<4x1024xf32>
    %c0_9 = arith.constant 0 : index
    %c0_10 = arith.constant 0 : index
    %c63 = arith.constant 63 : index
    %25 = vector.load %arg1[%c0_9, %c0_10, %c63] : memref<1x4x1152xbf16, #tpu.memory_space<vmem>>, vector<1x4x1024xbf16>
    %26 = vector.shape_cast %25 : vector<1x4x1024xbf16> to vector<4x1024xbf16>
    %c3 = arith.constant 3 : index
    %c0_11 = arith.constant 0 : index
    %c0_12 = arith.constant 0 : index
    %27 = vector.load %arg2[%c3, %c0_11, %c0_12] : memref<9x4x4xbf16, #tpu.memory_space<vmem>>, vector<1x4x4xbf16>
    %28 = vector.shape_cast %27 : vector<1x4x4xbf16> to vector<4x4xbf16>
    %cst_13 = arith.constant dense<0.000000e+00> : vector<4x1024xf32>
    %29 = tpu.matmul %28, %26, %cst_13 {dimension_numbers = #tpu.dot_dimension_numbers<[1], [0], [0], [1], [0, 0, 1, 1], [], []>} : vector<4x4xbf16>, vector<4x1024xbf16>, vector<4x1024xf32> -> vector<4x1024xf32>
    %30 = arith.addf %24, %29 : vector<4x1024xf32>
    %c0_14 = arith.constant 0 : index
    %c0_15 = arith.constant 0 : index
    %c95 = arith.constant 95 : index
    %31 = vector.load %arg1[%c0_14, %c0_15, %c95] : memref<1x4x1152xbf16, #tpu.memory_space<vmem>>, vector<1x4x1024xbf16>
    %32 = vector.shape_cast %31 : vector<1x4x1024xbf16> to vector<4x1024xbf16>
    %c6 = arith.constant 6 : index
    %c0_16 = arith.constant 0 : index
    %c0_17 = arith.constant 0 : index
    %33 = vector.load %arg2[%c6, %c0_16, %c0_17] : memref<9x4x4xbf16, #tpu.memory_space<vmem>>, vector<1x4x4xbf16>
    %34 = vector.shape_cast %33 : vector<1x4x4xbf16> to vector<4x4xbf16>
    %cst_18 = arith.constant dense<0.000000e+00> : vector<4x1024xf32>
    %35 = tpu.matmul %34, %32, %cst_18 {dimension_numbers = #tpu.dot_dimension_numbers<[1], [0], [0], [1], [0, 0, 1, 1], [], []>} : vector<4x4xbf16>, vector<4x1024xbf16>, vector<4x1024xf32> -> vector<4x1024xf32>
    %36 = arith.addf %30, %35 : vector<4x1024xf32>
    %c1_i32_19 = arith.constant 1 : i32
    %37 = vector.broadcast %c1_i32_19 : i32 to vector<1x1024xi32>
    %38 = arith.cmpi sge, %16, %37 : vector<1x1024xi32>
    %cst_20 = arith.constant 0.000000e+00 : f32
    %39 = vector.shape_cast %38 : vector<1x1024xi1> to vector<1x1024xi1>
    %40 = vector.broadcast %39 : vector<1x1024xi1> to vector<4x1024xi1>
    %41 = vector.broadcast %cst_20 : f32 to vector<4x1024xf32>
    %42 = arith.select %40, %36, %41 : vector<4x1024xi1>, vector<4x1024xf32>
    %43 = arith.addf %17, %42 : vector<4x1024xf32>
    %cst_21 = arith.constant 0.000000e+00 : f32
    %44 = vector.broadcast %cst_21 : f32 to vector<4x1024xf32>
    %c0_22 = arith.constant 0 : index
    %c0_23 = arith.constant 0 : index
    %c32 = arith.constant 32 : index
    %45 = vector.load %arg1[%c0_22, %c0_23, %c32] : memref<1x4x1152xbf16, #tpu.memory_space<vmem>>, vector<1x4x1024xbf16>
    %46 = vector.shape_cast %45 : vector<1x4x1024xbf16> to vector<4x1024xbf16>
    %c1 = arith.constant 1 : index
    %c0_24 = arith.constant 0 : index
    %c0_25 = arith.constant 0 : index
    %47 = vector.load %arg2[%c1, %c0_24, %c0_25] : memref<9x4x4xbf16, #tpu.memory_space<vmem>>, vector<1x4x4xbf16>
    %48 = vector.shape_cast %47 : vector<1x4x4xbf16> to vector<4x4xbf16>
    %cst_26 = arith.constant dense<0.000000e+00> : vector<4x1024xf32>
    %49 = tpu.matmul %48, %46, %cst_26 {dimension_numbers = #tpu.dot_dimension_numbers<[1], [0], [0], [1], [0, 0, 1, 1], [], []>} : vector<4x4xbf16>, vector<4x1024xbf16>, vector<4x1024xf32> -> vector<4x1024xf32>
    %50 = arith.addf %44, %49 : vector<4x1024xf32>
    %c0_27 = arith.constant 0 : index
    %c0_28 = arith.constant 0 : index
    %c64 = arith.constant 64 : index
    %51 = vector.load %arg1[%c0_27, %c0_28, %c64] : memref<1x4x1152xbf16, #tpu.memory_space<vmem>>, vector<1x4x1024xbf16>
    %52 = vector.shape_cast %51 : vector<1x4x1024xbf16> to vector<4x1024xbf16>
    %c4 = arith.constant 4 : index
    %c0_29 = arith.constant 0 : index
    %c0_30 = arith.constant 0 : index
    %53 = vector.load %arg2[%c4, %c0_29, %c0_30] : memref<9x4x4xbf16, #tpu.memory_space<vmem>>, vector<1x4x4xbf16>
    %54 = vector.shape_cast %53 : vector<1x4x4xbf16> to vector<4x4xbf16>
    %cst_31 = arith.constant dense<0.000000e+00> : vector<4x1024xf32>
    %55 = tpu.matmul %54, %52, %cst_31 {dimension_numbers = #tpu.dot_dimension_numbers<[1], [0], [0], [1], [0, 0, 1, 1], [], []>} : vector<4x4xbf16>, vector<4x1024xbf16>, vector<4x1024xf32> -> vector<4x1024xf32>
    %56 = arith.addf %50, %55 : vector<4x1024xf32>
    %c0_32 = arith.constant 0 : index
    %c0_33 = arith.constant 0 : index
    %c96 = arith.constant 96 : index
    %57 = vector.load %arg1[%c0_32, %c0_33, %c96] : memref<1x4x1152xbf16, #tpu.memory_space<vmem>>, vector<1x4x1024xbf16>
    %58 = vector.shape_cast %57 : vector<1x4x1024xbf16> to vector<4x1024xbf16>
    %c7 = arith.constant 7 : index
    %c0_34 = arith.constant 0 : index
    %c0_35 = arith.constant 0 : index
    %59 = vector.load %arg2[%c7, %c0_34, %c0_35] : memref<9x4x4xbf16, #tpu.memory_space<vmem>>, vector<1x4x4xbf16>
    %60 = vector.shape_cast %59 : vector<1x4x4xbf16> to vector<4x4xbf16>
    %cst_36 = arith.constant dense<0.000000e+00> : vector<4x1024xf32>
    %61 = tpu.matmul %60, %58, %cst_36 {dimension_numbers = #tpu.dot_dimension_numbers<[1], [0], [0], [1], [0, 0, 1, 1], [], []>} : vector<4x4xbf16>, vector<4x1024xbf16>, vector<4x1024xf32> -> vector<4x1024xf32>
    %62 = arith.addf %56, %61 : vector<4x1024xf32>
    %63 = arith.addf %43, %62 : vector<4x1024xf32>
    %cst_37 = arith.constant 0.000000e+00 : f32
    %64 = vector.broadcast %cst_37 : f32 to vector<4x1024xf32>
    %c0_38 = arith.constant 0 : index
    %c0_39 = arith.constant 0 : index
    %c33 = arith.constant 33 : index
    %65 = vector.load %arg1[%c0_38, %c0_39, %c33] : memref<1x4x1152xbf16, #tpu.memory_space<vmem>>, vector<1x4x1024xbf16>
    %66 = vector.shape_cast %65 : vector<1x4x1024xbf16> to vector<4x1024xbf16>
    %c2 = arith.constant 2 : index
    %c0_40 = arith.constant 0 : index
    %c0_41 = arith.constant 0 : index
    %67 = vector.load %arg2[%c2, %c0_40, %c0_41] : memref<9x4x4xbf16, #tpu.memory_space<vmem>>, vector<1x4x4xbf16>
    %68 = vector.shape_cast %67 : vector<1x4x4xbf16> to vector<4x4xbf16>
    %cst_42 = arith.constant dense<0.000000e+00> : vector<4x1024xf32>
    %69 = tpu.matmul %68, %66, %cst_42 {dimension_numbers = #tpu.dot_dimension_numbers<[1], [0], [0], [1], [0, 0, 1, 1], [], []>} : vector<4x4xbf16>, vector<4x1024xbf16>, vector<4x1024xf32> -> vector<4x1024xf32>
    %70 = arith.addf %64, %69 : vector<4x1024xf32>
    %c0_43 = arith.constant 0 : index
    %c0_44 = arith.constant 0 : index
    %c65 = arith.constant 65 : index
    %71 = vector.load %arg1[%c0_43, %c0_44, %c65] : memref<1x4x1152xbf16, #tpu.memory_space<vmem>>, vector<1x4x1024xbf16>
    %72 = vector.shape_cast %71 : vector<1x4x1024xbf16> to vector<4x1024xbf16>
    %c5 = arith.constant 5 : index
    %c0_45 = arith.constant 0 : index
    %c0_46 = arith.constant 0 : index
    %73 = vector.load %arg2[%c5, %c0_45, %c0_46] : memref<9x4x4xbf16, #tpu.memory_space<vmem>>, vector<1x4x4xbf16>
    %74 = vector.shape_cast %73 : vector<1x4x4xbf16> to vector<4x4xbf16>
    %cst_47 = arith.constant dense<0.000000e+00> : vector<4x1024xf32>
    %75 = tpu.matmul %74, %72, %cst_47 {dimension_numbers = #tpu.dot_dimension_numbers<[1], [0], [0], [1], [0, 0, 1, 1], [], []>} : vector<4x4xbf16>, vector<4x1024xbf16>, vector<4x1024xf32> -> vector<4x1024xf32>
    %76 = arith.addf %70, %75 : vector<4x1024xf32>
    %c0_48 = arith.constant 0 : index
    %c0_49 = arith.constant 0 : index
    %c97 = arith.constant 97 : index
    %77 = vector.load %arg1[%c0_48, %c0_49, %c97] : memref<1x4x1152xbf16, #tpu.memory_space<vmem>>, vector<1x4x1024xbf16>
    %78 = vector.shape_cast %77 : vector<1x4x1024xbf16> to vector<4x1024xbf16>
    %c8 = arith.constant 8 : index
    %c0_50 = arith.constant 0 : index
    %c0_51 = arith.constant 0 : index
    %79 = vector.load %arg2[%c8, %c0_50, %c0_51] : memref<9x4x4xbf16, #tpu.memory_space<vmem>>, vector<1x4x4xbf16>
    %80 = vector.shape_cast %79 : vector<1x4x4xbf16> to vector<4x4xbf16>
    %cst_52 = arith.constant dense<0.000000e+00> : vector<4x1024xf32>
    %81 = tpu.matmul %80, %78, %cst_52 {dimension_numbers = #tpu.dot_dimension_numbers<[1], [0], [0], [1], [0, 0, 1, 1], [], []>} : vector<4x4xbf16>, vector<4x1024xbf16>, vector<4x1024xf32> -> vector<4x1024xf32>
    %82 = arith.addf %76, %81 : vector<4x1024xf32>
    %c31_i32 = arith.constant 31 : i32
    %83 = vector.broadcast %c31_i32 : i32 to vector<1x1024xi32>
    %84 = arith.cmpi slt, %16, %83 : vector<1x1024xi32>
    %cst_53 = arith.constant 0.000000e+00 : f32
    %85 = vector.shape_cast %84 : vector<1x1024xi1> to vector<1x1024xi1>
    %86 = vector.broadcast %85 : vector<1x1024xi1> to vector<4x1024xi1>
    %87 = vector.broadcast %cst_53 : f32 to vector<4x1024xf32>
    %88 = arith.select %86, %82, %87 : vector<4x1024xi1>, vector<4x1024xf32>
    %89 = arith.addf %63, %88 : vector<4x1024xf32>
    %c0_54 = arith.constant 0 : index
    %c0_55 = arith.constant 0 : index
    %90 = vector.load %arg3[%c0_54, %c0_55] : memref<4x1xf32, #tpu.memory_space<vmem>>, vector<4x1xf32>
    %91 = vector.broadcast %90 : vector<4x1xf32> to vector<4x1024xf32>
    %92 = arith.addf %89, %91 : vector<4x1024xf32>
    %c0_56 = arith.constant 0 : index
    %c0_57 = arith.constant 0 : index
    %c0_58 = arith.constant 0 : index
    %93 = vector.load %arg4[%c0_56, %c0_57, %c0_58] : memref<1x4x1024xf32, #tpu.memory_space<vmem>>, vector<1x4x1024xf32>
    %94 = vector.shape_cast %93 : vector<1x4x1024xf32> to vector<4x1024xf32>
    %95 = vector.shape_cast %92 : vector<4x1024xf32> to vector<1x4x1024xf32>
    tpu.vector_store %arg4[%c0_56, %c0_57, %c0_58], %95 {strides = array<i32>} : memref<1x4x1024xf32, #tpu.memory_space<vmem>>, vector<1x4x1024xf32>,
    return
  }
  func.func @transform_0(%arg0: i32) -> (i32, i32, i32) {
    %c0_i32 = arith.constant 0 : i32
    %c0_i32_0 = arith.constant 0 : i32
    %c0_i32_1 = arith.constant 0 : i32
    return %arg0, %c0_i32, %c0_i32_0 : i32, i32, i32
  }
  func.func @transform_1(%arg0: i32) -> (i32, i32, i32) {
    %c0_i32 = arith.constant 0 : i32
    %c0_i32_0 = arith.constant 0 : i32
    %c0_i32_1 = arith.constant 0 : i32
    %c0_i32_2 = arith.constant 0 : i32
    return %c0_i32, %c0_i32_0, %c0_i32_1 : i32, i32, i32
  }
  func.func @transform_2(%arg0: i32) -> (i32, i32) {
    %c0_i32 = arith.constant 0 : i32
    %c0_i32_0 = arith.constant 0 : i32
    %c0_i32_1 = arith.constant 0 : i32
    return %c0_i32, %c0_i32_0 : i32, i32
  }
  func.func @transform_3(%arg0: i32) -> (i32, i32, i32) {
    %c0_i32 = arith.constant 0 : i32
    %c0_i32_0 = arith.constant 0 : i32
    %c0_i32_1 = arith.constant 0 : i32
    return %arg0, %c0_i32, %c0_i32_0 : i32, i32, i32
  }
}

</mosaic_0001>

<llo_original>
// kernel: decoder_map_forward.1
$region0: #{decoder_map_forward.1}
  #allocation0 [shape = 'u32[]', space=smem, size = 0x4, offset = 0x4, fixed_abs, tag = 'smem constant byte address 0x4 - core index']
  #allocation1 [shape = 'u32[144,128]{1,0:T(1,128)}', space=vmem, size = 0x12000, scoped, tag = 'internal scratch']
  %s0 = inlined_call_operand.vmem [shape: bf16[2,4,1152], index: 0, kind: input, shape index: {}]
  %s1 = inlined_call_operand.vmem [shape: bf16[9,4,4], index: 1, kind: input, shape index: {}]
  %s2 = inlined_call_operand.vmem [shape: f32[4,1], index: 2, kind: input, shape index: {}]
  %s3 = inlined_call_operand.vmem [shape: f32[2,4,1024], index: 3, kind: output, shape index: {}]
  %s4 = sld [smem:[#allocation0]]
  $region45: #{decoder_map_forward.1} parent=0
    _
  %s6 = ssub.s32 1, %s4
  %s7 = scalar_select 0, %s6, %s4
  loop: start=0, step=1, limit=4
  $region2: #{decoder_map_forward.1} parent=0 // loop_pre_header
    _
  $region3: #{decoder_map_forward.1} parent=0 // loop_header
    %s9 = sphi 0, %s13
    %p10 = scmp.ge.s32.totalorder %s9, 4
    %s19 = sphi 0, %s21
    %s22 = sphi 0, %s19
    %s23 = sphi 0, %s22
    %s39 = sphi 0, %s23
    %s43 = sphi 0, %s43
    %s45 = sphi 0, %s43
    %s46 = sphi 0, %s45
    %s60 = sphi 0, %s46
    %s64 = sphi 0, %s64
    %s66 = sphi 0, %s64
    %s67 = sphi 0, %s66
    %s81 = sphi 0, %s67
    %s87 = sphi 0, %s89
    %s90 = sphi 0, %s87
    %s91 = sphi 0, %s90
    %s107 = sphi 0, %s91
  $region4: #{decoder_map_forward.1} parent=0 // loop_header_branch
    %12 = sbr.rel (%p10) target = $region8
  $region5: #{decoder_map_forward.1} parent=0 // loop_body
    %s14 = ssub.s32 %s9, 1
    %s15 = ssub.s32 %s9, 2
    %s16 = sadd.s32 %s9, 1
    %s17 = ssub.s32 %s9, %s16
    %p18 = scmp.eq.s32.totalorder %s17, 0
    %s20 = sadd.s32 %s19, 1
    %s21 = scalar_select %p18, %s19, %s20
    %p24 = pneg %p18
    %p25 = scmp.eq.s32.totalorder %s9, 1
    %p26 = por %p24, %p25
    %p27 = scmp.ne.s32.totalorder %s19, %s22
    %p28 = scmp.eq.s32.totalorder %s9, 0
    %p29 = por %p27, %p28
    %p30 = scmp.ne.s32.totalorder %s19, %s22
    %p31 = scmp.eq.s32.totalorder %s14, 1
    %p32 = por %p30, %p31
    %p33 = scmp.ne.s32.totalorder %s22, %s23
    %p34 = scmp.eq.s32.totalorder %s14, 0
    %p35 = por %p33, %p34
    %p36 = scmp.ne.s32.totalorder %s22, %s23
    %p37 = scmp.eq.s32.totalorder %s15, 1
    %p38 = por %p36, %p37
    %p40 = scmp.ne.s32.totalorder %s23, %s39
    %p41 = scmp.eq.s32.totalorder %s15, 0
    %p42 = por %p40, %p41
    %s44 = sadd.s32 %s43, 1
    %p47 = scmp.eq.s32.totalorder %s9, 1
    %p48 = scmp.ne.s32.totalorder %s43, %s45
    %p49 = scmp.eq.s32.totalorder %s9, 0
    %p50 = por %p48, %p49
    %p51 = scmp.ne.s32.totalorder %s43, %s45
    %p52 = scmp.eq.s32.totalorder %s14, 1
    %p53 = por %p51, %p52
    %p54 = scmp.ne.s32.totalorder %s45, %s46
    %p55 = scmp.eq.s32.totalorder %s14, 0
    %p56 = por %p54, %p55
    %p57 = scmp.ne.s32.totalorder %s45, %s46
    %p58 = scmp.eq.s32.totalorder %s15, 1
    %p59 = por %p57, %p58
    %p61 = scmp.ne.s32.totalorder %s46, %s60
    %p62 = scmp.eq.s32.totalorder %s15, 0
    %p63 = por %p61, %p62
    %s65 = sadd.s32 %s64, 1
    %p68 = scmp.eq.s32.totalorder %s9, 1
    %p69 = scmp.ne.s32.totalorder %s64, %s66
    %p70 = scmp.eq.s32.totalorder %s9, 0
    %p71 = por %p69, %p70
    %p72 = scmp.ne.s32.totalorder %s64, %s66
    %p73 = scmp.eq.s32.totalorder %s14, 1
    %p74 = por %p72, %p73
    %p75 = scmp.ne.s32.totalorder %s66, %s67
    %p76 = scmp.eq.s32.totalorder %s14, 0
    %p77 = por %p75, %p76
    %p78 = scmp.ne.s32.totalorder %s66, %s67
    %p79 = scmp.eq.s32.totalorder %s15, 1
    %p80 = por %p78, %p79
    %p82 = scmp.ne.s32.totalorder %s67, %s81
    %p83 = scmp.eq.s32.totalorder %s15, 0
    %p84 = por %p82, %p83
    %s85 = ssub.s32 %s9, %s16
    %p86 = scmp.eq.s32.totalorder %s85, 0
    %s88 = sadd.s32 %s87, 1
    %s89 = scalar_select %p86, %s87, %s88
    %p92 = pneg %p86
    %p93 = scmp.eq.s32.totalorder %s9, 1
    %p94 = por %p92, %p93
    %p95 = scmp.ne.s32.totalorder %s87, %s90
    %p96 = scmp.eq.s32.totalorder %s9, 0
    %p97 = por %p95, %p96
    %p98 = scmp.ne.s32.totalorder %s87, %s90
    %p99 = scmp.eq.s32.totalorder %s14, 1
    %p100 = por %p98, %p99
    %p101 = scmp.ne.s32.totalorder %s90, %s91
    %p102 = scmp.eq.s32.totalorder %s14, 0
    %p103 = por %p101, %p102
    %p104 = scmp.ne.s32.totalorder %s90, %s91
    %p105 = scmp.eq.s32.totalorder %s15, 1
    %p106 = por %p104, %p105
    %p108 = scmp.ne.s32.totalorder %s91, %s107
    %p109 = scmp.eq.s32.totalorder %s15, 0
    %p110 = por %p108, %p109
    %p111 = scmp.le.s32.totalorder 1, %s9
    %p112 = scmp.lt.s32.totalorder %s9, 3
    %p113 = pnand %p111, %p112
    %p114 = pneg %p113
    // Predicated region
    $region9: #{decoder_map_forward.1} parent=5 // pred_check
      _
    $region10: #{decoder_map_forward.1} parent=5 // pred_check_branch
      %116 = sbr.rel (%p113) target = $region12
    $region11: #{decoder_map_forward.1} parent=5 // pred_region
      %s117 = ssub.s32 %s9, 1
      // Predicated region
      $region13: #{decoder_map_forward.1} parent=11 // pred_check
        %p118 = pneg %p56
      $region14: #{decoder_map_forward.1} parent=11 // pred_check_branch
        %120 = sbr.rel (%p118) target = $region16
      $region15: #{decoder_map_forward.1} parent=11 // pred_region
        _
      $region16: #{decoder_map_forward.1} parent=11 // pred_fallthru
        _
      // Predicated region
      $region17: #{decoder_map_forward.1} parent=11 // pred_check
        %p121 = pneg %p77
      $region18: #{decoder_map_forward.1} parent=11 // pred_check_branch
        %123 = sbr.rel (%p121) target = $region20
      $region19: #{decoder_map_forward.1} parent=11 // pred_region
        _
      $region20: #{decoder_map_forward.1} parent=11 // pred_fallthru
        _
    $region12: #{decoder_map_forward.1} parent=5 // pred_fallthru
      _
    %p124 = scmp.lt.s32.totalorder %s9, 2
    // Predicated region
    $region21: #{decoder_map_forward.1} parent=5 // pred_check
      %p125 = pneg %p124
    $region22: #{decoder_map_forward.1} parent=5 // pred_check_branch
      %127 = sbr.rel (%p125) target = $region24
    $region23: #{decoder_map_forward.1} parent=5 // pred_region
      // Predicated region
      $region25: #{decoder_map_forward.1} parent=23 // pred_check
        %p128 = pneg %p29
      $region26: #{decoder_map_forward.1} parent=23 // pred_check_branch
        %130 = sbr.rel (%p128) target = $region28
      $region27: #{decoder_map_forward.1} parent=23 // pred_region
        %p131 = scmp.lt.s32.totalorder %s9, 1
        %s132 = scalar_select %p131, %s9, 1
        %s133 = smul.addr %s132, 9
        %s134 = smul.addr %s133, 2
        %s135 = scalar_lea.vmem %s0, %s134
      $region28: #{decoder_map_forward.1} parent=23 // pred_fallthru
        _
    $region24: #{decoder_map_forward.1} parent=5 // pred_fallthru
      _
    %p136 = scmp.le.s32.totalorder 1, %s9
    %p137 = scmp.lt.s32.totalorder %s9, 3
    %p138 = pnand %p136, %p137
    %p139 = pneg %p138
    // Predicated region
    $region29: #{decoder_map_forward.1} parent=5 // pred_check
      _
    $region30: #{decoder_map_forward.1} parent=5 // pred_check_branch
      %141 = sbr.rel (%p138) target = $region32
    $region31: #{decoder_map_forward.1} parent=5 // pred_region
      %s142 = ssub.s32 %s9, 1
      %p143 = scmp.lt.s32.totalorder %s14, 1
      %s144 = scalar_select %p143, %s14, 1
      %s145 = smul.addr %s144, 9
      %s146 = smul.addr %s145, 2
      %s147 = scalar_lea.vmem %s0, %s146
      %p148 = pneg %p35
      %p149 = pneg %p32
      %p150 = pneg %p56
      %p151 = pneg %p53
      %p152 = pneg %p77
      %p153 = pneg %p74
      %p154 = pneg %p103
      %p155 = pneg %p100
      %p156 = scmp.lt.s32.totalorder %s14, 1
      %s157 = scalar_select %p156, %s14, 1
      %s158 = smul.addr %s157, 8
      %s159 = smul.addr %s158, 4
      %s160 = scalar_lea.vmem %s3, %s159
      %p161 = scmp.lt.s32.totalorder %s14, 1
      %s162 = scalar_select %p161, %s14, 1
      %s163 = smul.addr %s162, 9
      %s164 = smul.addr %s163, 2
      %s165 = scalar_lea.vmem %s0, %s164
      %p166 = scmp.lt.s32.totalorder %s14, 1
      %s167 = scalar_select %p166, %s14, 1
      %s168 = smul.addr %s167, 8
      %s169 = smul.addr %s168, 4
      %s170 = scalar_lea.vmem %s3, %s169
      %v172 = vlaneseq
      %v173 = vand.u32 %v172, 127
      %v174 = vadd.s32 %v173, 128
      %v175 = vadd.s32 %v173, 256
      %v176 = vadd.s32 %v173, 384
      %v177 = vadd.s32 %v173, 512
      %v178 = vadd.s32 %v173, 640
      %v179 = vadd.s32 %v173, 768
      %v180 = vadd.s32 %v173, 896
      %vm181 = vcmp.lt.s32.totalorder %v173, 0
      %v182 = vsub.s32 0, %v173
      %v183 = vsel %vm181, %v182, %v173
      %v184 = vshrl.u32 %v183, 5
      %v185 = vand.u32 %v183, 31
      %v186 = vsub.s32 0, %v185
      %v187 = vsel %vm181, %v186, %v185
      %vm188 = vcmp.lt.s32.totalorder %v174, 0
      %v189 = vsub.s32 0, %v174
      %v190 = vsel %vm188, %v189, %v174
      %v191 = vshrl.u32 %v190, 5
      %v192 = vand.u32 %v190, 31
      %v193 = vsub.s32 0, %v192
      %v194 = vsel %vm188, %v193, %v192
      %vm195 = vcmp.lt.s32.totalorder %v175, 0
      %v196 = vsub.s32 0, %v175
      %v197 = vsel %vm195, %v196, %v175
      %v198 = vshrl.u32 %v197, 5
      %v199 = vand.u32 %v197, 31
      %v200 = vsub.s32 0, %v199
      %v201 = vsel %vm195, %v200, %v199
      %vm202 = vcmp.lt.s32.totalorder %v176, 0
      %v203 = vsub.s32 0, %v176
      %v204 = vsel %vm202, %v203, %v176
      %v205 = vshrl.u32 %v204, 5
      %v206 = vand.u32 %v204, 31
      %v207 = vsub.s32 0, %v206
      %v208 = vsel %vm202, %v207, %v206
      %vm209 = vcmp.lt.s32.totalorder %v177, 0
      %v210 = vsub.s32 0, %v177
      %v211 = vsel %vm209, %v210, %v177
      %v212 = vshrl.u32 %v211, 5
      %v213 = vand.u32 %v211, 31
      %v214 = vsub.s32 0, %v213
      %v215 = vsel %vm209, %v214, %v213
      %vm216 = vcmp.lt.s32.totalorder %v178, 0
      %v217 = vsub.s32 0, %v178
      %v218 = vsel %vm216, %v217, %v178
      %v219 = vshrl.u32 %v218, 5
      %v220 = vand.u32 %v218, 31
      %v221 = vsub.s32 0, %v220
      %v222 = vsel %vm216, %v221, %v220
      %vm223 = vcmp.lt.s32.totalorder %v179, 0
      %v224 = vsub.s32 0, %v179
      %v225 = vsel %vm223, %v224, %v179
      %v226 = vshrl.u32 %v225, 5
      %v227 = vand.u32 %v225, 31
      %v228 = vsub.s32 0, %v227
      %v229 = vsel %vm223, %v228, %v227
      %vm230 = vcmp.lt.s32.totalorder %v180, 0
      %v231 = vsub.s32 0, %v180
      %v232 = vsel %vm230, %v231, %v180
      %v233 = vshrl.u32 %v232, 5
      %v234 = vand.u32 %v232, 31
      %v235 = vsub.s32 0, %v234
      %v236 = vsel %vm230, %v235, %v234
      %vm237 = vcmp.ne.s32.totalorder %v187, 0
      %vm238 = vcmp.ne.s32.totalorder %v194, 0
      %vm239 = vcmp.ne.s32.totalorder %v201, 0
      %vm240 = vcmp.ne.s32.totalorder %v208, 0
      %vm241 = vcmp.ne.s32.totalorder %v215, 0
      %vm242 = vcmp.ne.s32.totalorder %v222, 0
      %vm243 = vcmp.ne.s32.totalorder %v229, 0
      %vm244 = vcmp.ne.s32.totalorder %v236, 0
      %vm245 = vcmp.lt.s32.totalorder %v187, 0
      %vm246 = vcmp.lt.s32.totalorder %v194, 0
      %vm247 = vcmp.lt.s32.totalorder %v201, 0
      %vm248 = vcmp.lt.s32.totalorder %v208, 0
      %vm249 = vcmp.lt.s32.totalorder %v215, 0
      %vm250 = vcmp.lt.s32.totalorder %v222, 0
      %vm251 = vcmp.lt.s32.totalorder %v229, 0
      %vm252 = vcmp.lt.s32.totalorder %v236, 0
      %vm253 = vmand %vm245, %vm237
      %vm254 = vmand %vm246, %vm238
      %vm255 = vmand %vm247, %vm239
      %vm256 = vmand %vm248, %vm240
      %vm257 = vmand %vm249, %vm241
      %vm258 = vmand %vm250, %vm242
      %vm259 = vmand %vm251, %vm243
      %vm260 = vmand %vm252, %vm244
      %v261 = vadd.s32 %v187, 32
      %v262 = vadd.s32 %v194, 32
      %v263 = vadd.s32 %v201, 32
      %v264 = vadd.s32 %v208, 32
      %v265 = vadd.s32 %v215, 32
      %v266 = vadd.s32 %v222, 32
      %v267 = vadd.s32 %v229, 32
      %v268 = vadd.s32 %v236, 32
      %v269 = vsel %vm253, %v261, %v187
      %v270 = vsel %vm254, %v262, %v194
      %v271 = vsel %vm255, %v263, %v201
      %v272 = vsel %vm256, %v264, %v208
      %v273 = vsel %vm257, %v265, %v215
      %v274 = vsel %vm258, %v266, %v222
      %v275 = vsel %vm259, %v267, %v229
      %v276 = vsel %vm260, %v268, %v236
      %v277 = vld [vmem:[%s165] sm:$0xff]
      %v278 = vld [vmem:[%s165 + $0x8] sm:$0xff]
      %v279 = vld [vmem:[%s165 + $0x10] sm:$0x3]
      %v280 = vld [vmem:[%s1] sm:$0x3]
      %s281 = scalar_lea.vmem %s1, 6
      %v282 = vld [vmem:[%s281] sm:$0x3]
      %v286 = vcombine.high %v277, %v277
      %v288 = vunpack.c.l.s4 1983009808
      %v289 = vunpack.c.0.s8 %v288
      %v290 = vlaneseq
      %v291 = vshrl.u32 %v290, 7
      %v292 = vsub.s32 %v289, %v291
      %v293 = vrot.slane %v277, %v292
      %v295 = vunpack.c.l.s4 1983009808
      %v296 = vunpack.c.0.s8 %v295
      %v297 = vlaneseq
      %v298 = vshrl.u32 %v297, 7
      %v299 = vsub.s32 %v296, %v298
      %v300 = vrot.slane %v286, %v299
      %v301 = vcombine.high %v293, %v293
      %v302 = vcombine.high %v300, %v300
      %v303 = vcombine.high %v278, %v278
      %v305 = vunpack.c.l.s4 1983009808
      %v306 = vunpack.c.0.s8 %v305
      %v307 = vlaneseq
      %v308 = vshrl.u32 %v307, 7
      %v309 = vsub.s32 %v306, %v308
      %v310 = vrot.slane %v278, %v309
      %v312 = vunpack.c.l.s4 1983009808
      %v313 = vunpack.c.0.s8 %v312
      %v314 = vlaneseq
      %v315 = vshrl.u32 %v314, 7
      %v316 = vsub.s32 %v313, %v315
      %v317 = vrot.slane %v303, %v316
      %v318 = vcombine.high %v310, %v310
      %v319 = vcombine.high %v317, %v317
      %v321 = vunpack.c.l.s4 1983009808
      %v322 = vunpack.c.0.s8 %v321
      %v323 = vlaneseq
      %v324 = vshrl.u32 %v323, 7
      %v325 = vsub.s32 %v322, %v324
      %v326 = vrot.slane %v279, %v325
      %327 = vrot.lane.b32.xlu0 %v293, 65
      %v328 = vpop.permute.xlu0 %327
      %329 = vrot.lane.b32.xlu0 %v301, 65
      %v330 = vpop.permute.xlu0 %329
      %331 = vrot.lane.b32.xlu0 %v300, 65
      %v332 = vpop.permute.xlu0 %331
      %333 = vrot.lane.b32.xlu0 %v302, 65
      %v334 = vpop.permute.xlu0 %333
      %335 = vrot.lane.b32.xlu0 %v310, 65
      %v336 = vpop.permute.xlu0 %335
      %337 = vrot.lane.b32.xlu0 %v318, 65
      %v338 = vpop.permute.xlu0 %337
      %339 = vrot.lane.b32.xlu0 %v317, 65
      %v340 = vpop.permute.xlu0 %339
      %341 = vrot.lane.b32.xlu0 %v319, 65
      %v342 = vpop.permute.xlu0 %341
      %343 = vrot.lane.b32.xlu0 %v326, 65
      %v344 = vpop.permute.xlu0 %343
      %vm345 = vcmask 531456
      %v346 = vsel %vm345, %v328, %v330
      %v347 = vsel %vm345, %v330, %v332
      %v348 = vsel %vm345, %v332, %v334
      %v349 = vsel %vm345, %v334, %v336
      %v350 = vsel %vm345, %v336, %v338
      %v351 = vsel %vm345, %v338, %v340
      %v352 = vsel %vm345, %v340, %v342
      %v353 = vsel %vm345, %v342, %v344
      %vm354 = vcmask 31744
      %v356 = vsel %vm354, %v282, 0
      %vm358 = vcmask 1041408
      %v360 = vsel %vm358, %v346, 0
      %v363 = vsel %vm358, %v347, 0
      %v366 = vsel %vm358, %v348, 0
      %v369 = vsel %vm358, %v349, 0
      %v372 = vsel %vm358, %v350, 0
      %v375 = vsel %vm358, %v351, 0
      %v378 = vsel %vm358, %v352, 0
      %v381 = vsel %vm358, %v353, 0
      %383 = vmatprep.subr.bf16.mxu0 0
      %384 = vmatpush1.bf16.msra.mxu0 0
      %385 = vmatprep.subr.bf16.mxu0 0
      %386 = vmatpush1.bf16.msra.mxu0 0
      %387 = vmatprep.subr.bf16.mxu0 0
      %388 = vmatpush1.bf16.msra.mxu0 0
      %389 = vmatprep.subr.bf16.mxu0 0
      %390 = vmatpush1.bf16.msra.mxu0 0
      %391 = vmatprep.subr.bf16.mxu0 0
      %392 = vmatpush1.bf16.msra.mxu0 0
      %393 = vmatprep.subr.bf16.mxu0 0
      %394 = vmatpush1.bf16.msra.mxu0 0
      %395 = vmatprep.subr.bf16.mxu0 0
      %396 = vmatpush1.bf16.msra.mxu0 0
      %397 = vmatprep.subr.bf16.mxu0 %v363
      %398 = vmatpush1.bf16.msra.mxu0 %v360
      %399 = vmatprep.subr.bf16.mxu0 0
      %400 = vmatpush2.bf16.msra.mxu0 0
      %401 = vmatprep.subr.bf16.mxu0 0
      %402 = vmatpush2.bf16.msra.mxu0 0
      %403 = vmatprep.subr.bf16.mxu0 0
      %404 = vmatpush2.bf16.msra.mxu0 0
      %405 = vmatprep.subr.bf16.mxu0 0
      %406 = vmatpush2.bf16.msra.mxu0 0
      %407 = vmatprep.subr.bf16.mxu0 0
      %408 = vmatpush2.bf16.msra.mxu0 0
      %409 = vmatprep.subr.bf16.mxu0 0
      %410 = vmatpush2.bf16.msra.mxu0 0
      %411 = vmatprep.subr.bf16.mxu0 0
      %412 = vmatpush2.bf16.msra.mxu0 0
      %413 = vmatprep.subr.bf16.mxu0 0
      %414 = vmatpush2.bf16.msra.mxu0 0
      %415 = vmatprep.mubr.bf16.mxu0 0
      %416 = vmatmul.mubr.bf16.gmra.mxu0 %v356
      %v417 = vpop.f32.mrf.mxu0
      %v418 = vadd.f32 0.0, %v417
      %v419 = vpop.f32.mrf.mxu0
      %v420 = vadd.f32 0.0, %v419
      %v421 = vpop.f32.mrf.mxu0
      %v422 = vpop.f32.mrf.mxu0
      %423 = vdwg.mxu0
      %424 = vmatprep.subr.bf16.mxu0 0
      %425 = vmatpush1.bf16.msra.mxu0 0
      %426 = vmatprep.subr.bf16.mxu0 0
      %427 = vmatpush1.bf16.msra.mxu0 0
      %428 = vmatprep.subr.bf16.mxu0 0
      %429 = vmatpush1.bf16.msra.mxu0 0
      %430 = vmatprep.subr.bf16.mxu0 0
      %431 = vmatpush1.bf16.msra.mxu0 0
      %432 = vmatprep.subr.bf16.mxu0 0
      %433 = vmatpush1.bf16.msra.mxu0 0
      %434 = vmatprep.subr.bf16.mxu0 0
      %435 = vmatpush1.bf16.msra.mxu0 0
      %436 = vmatprep.subr.bf16.mxu0 0
      %437 = vmatpush1.bf16.msra.mxu0 0
      %438 = vmatprep.subr.bf16.mxu0 %v369
      %439 = vmatpush1.bf16.msra.mxu0 %v366
      %440 = vmatprep.subr.bf16.mxu0 0
      %441 = vmatpush2.bf16.msra.mxu0 0
      %442 = vmatprep.subr.bf16.mxu0 0
      %443 = vmatpush2.bf16.msra.mxu0 0
      %444 = vmatprep.subr.bf16.mxu0 0
      %445 = vmatpush2.bf16.msra.mxu0 0
      %446 = vmatprep.subr.bf16.mxu0 0
      %447 = vmatpush2.bf16.msra.mxu0 0
      %448 = vmatprep.subr.bf16.mxu0 0
      %449 = vmatpush2.bf16.msra.mxu0 0
      %450 = vmatprep.subr.bf16.mxu0 0
      %451 = vmatpush2.bf16.msra.mxu0 0
      %452 = vmatprep.subr.bf16.mxu0 0
      %453 = vmatpush2.bf16.msra.mxu0 0
      %454 = vmatprep.subr.bf16.mxu0 0
      %455 = vmatpush2.bf16.msra.mxu0 0
      %456 = vmatprep.mubr.bf16.mxu0 0
      %457 = vmatmul.mubr.bf16.gmra.mxu0 %v356
      %v458 = vpop.f32.mrf.mxu0
      %v459 = vadd.f32 0.0, %v458
      %v460 = vpop.f32.mrf.mxu0
      %v461 = vadd.f32 0.0, %v460
      %v462 = vpop.f32.mrf.mxu0
      %v463 = vpop.f32.mrf.mxu0
      %464 = vdwg.mxu0
      %465 = vmatprep.subr.bf16.mxu0 0
      %466 = vmatpush1.bf16.msra.mxu0 0
      %467 = vmatprep.subr.bf16.mxu0 0
      %468 = vmatpush1.bf16.msra.mxu0 0
      %469 = vmatprep.subr.bf16.mxu0 0
      %470 = vmatpush1.bf16.msra.mxu0 0
      %471 = vmatprep.subr.bf16.mxu0 0
      %472 = vmatpush1.bf16.msra.mxu0 0
      %473 = vmatprep.subr.bf16.mxu0 0
      %474 = vmatpush1.bf16.msra.mxu0 0
      %475 = vmatprep.subr.bf16.mxu0 0
      %476 = vmatpush1.bf16.msra.mxu0 0
      %477 = vmatprep.subr.bf16.mxu0 0
      %478 = vmatpush1.bf16.msra.mxu0 0
      %479 = vmatprep.subr.bf16.mxu0 %v375
      %480 = vmatpush1.bf16.msra.mxu0 %v372
      %481 = vmatprep.subr.bf16.mxu0 0
      %482 = vmatpush2.bf16.msra.mxu0 0
      %483 = vmatprep.subr.bf16.mxu0 0
      %484 = vmatpush2.bf16.msra.mxu0 0
      %485 = vmatprep.subr.bf16.mxu0 0
      %486 = vmatpush2.bf16.msra.mxu0 0
      %487 = vmatprep.subr.bf16.mxu0 0
      %488 = vmatpush2.bf16.msra.mxu0 0
      %489 = vmatprep.subr.bf16.mxu0 0
      %490 = vmatpush2.bf16.msra.mxu0 0
      %491 = vmatprep.subr.bf16.mxu0 0
      %492 = vmatpush2.bf16.msra.mxu0 0
      %493 = vmatprep.subr.bf16.mxu0 0
      %494 = vmatpush2.bf16.msra.mxu0 0
      %495 = vmatprep.subr.bf16.mxu0 0
      %496 = vmatpush2.bf16.msra.mxu0 0
      %497 = vmatprep.mubr.bf16.mxu0 0
      %498 = vmatmul.mubr.bf16.gmra.mxu0 %v356
      %v499 = vpop.f32.mrf.mxu0
      %v500 = vadd.f32 0.0, %v499
      %v501 = vpop.f32.mrf.mxu0
      %v502 = vadd.f32 0.0, %v501
      %v503 = vpop.f32.mrf.mxu0
      %v504 = vpop.f32.mrf.mxu0
      %505 = vdwg.mxu0
      %506 = vmatprep.subr.bf16.mxu0 0
      %507 = vmatpush1.bf16.msra.mxu0 0
      %508 = vmatprep.subr.bf16.mxu0 0
      %509 = vmatpush1.bf16.msra.mxu0 0
      %510 = vmatprep.subr.bf16.mxu0 0
      %511 = vmatpush1.bf16.msra.mxu0 0
      %512 = vmatprep.subr.bf16.mxu0 0
      %513 = vmatpush1.bf16.msra.mxu0 0
      %514 = vmatprep.subr.bf16.mxu0 0
      %515 = vmatpush1.bf16.msra.mxu0 0
      %516 = vmatprep.subr.bf16.mxu0 0
      %517 = vmatpush1.bf16.msra.mxu0 0
      %518 = vmatprep.subr.bf16.mxu0 0
      %519 = vmatpush1.bf16.msra.mxu0 0
      %520 = vmatprep.subr.bf16.mxu0 %v381
      %521 = vmatpush1.bf16.msra.mxu0 %v378
      %522 = vmatprep.subr.bf16.mxu0 0
      %523 = vmatpush2.bf16.msra.mxu0 0
      %524 = vmatprep.subr.bf16.mxu0 0
      %525 = vmatpush2.bf16.msra.mxu0 0
      %526 = vmatprep.subr.bf16.mxu0 0
      %527 = vmatpush2.bf16.msra.mxu0 0
      %528 = vmatprep.subr.bf16.mxu0 0
      %529 = vmatpush2.bf16.msra.mxu0 0
      %530 = vmatprep.subr.bf16.mxu0 0
      %531 = vmatpush2.bf16.msra.mxu0 0
      %532 = vmatprep.subr.bf16.mxu0 0
      %533 = vmatpush2.bf16.msra.mxu0 0
      %534 = vmatprep.subr.bf16.mxu0 0
      %535 = vmatpush2.bf16.msra.mxu0 0
      %536 = vmatprep.subr.bf16.mxu0 0
      %537 = vmatpush2.bf16.msra.mxu0 0
      %538 = vmatprep.mubr.bf16.mxu0 0
      %539 = vmatmul.mubr.bf16.gmra.mxu0 %v356
      %v540 = vpop.f32.mrf.mxu0
      %v541 = vadd.f32 0.0, %v540
      %v542 = vpop.f32.mrf.mxu0
      %v543 = vadd.f32 0.0, %v542
      %v544 = vpop.f32.mrf.mxu0
      %v545 = vpop.f32.mrf.mxu0
      %546 = vdwg.mxu0
      %547 = vrot.lane.b32.xlu0 %v293, 97
      %v548 = vpop.permute.xlu0 %547
      %549 = vrot.lane.b32.xlu0 %v301, 97
      %v550 = vpop.permute.xlu0 %549
      %551 = vrot.lane.b32.xlu0 %v300, 97
      %v552 = vpop.permute.xlu0 %551
      %553 = vrot.lane.b32.xlu0 %v302, 97
      %v554 = vpop.permute.xlu0 %553
      %555 = vrot.lane.b32.xlu0 %v310, 97
      %v556 = vpop.permute.xlu0 %555
      %557 = vrot.lane.b32.xlu0 %v318, 97
      %v558 = vpop.permute.xlu0 %557
      %559 = vrot.lane.b32.xlu0 %v317, 97
      %v560 = vpop.permute.xlu0 %559
      %561 = vrot.lane.b32.xlu0 %v319, 97
      %v562 = vpop.permute.xlu0 %561
      %563 = vrot.lane.b32.xlu0 %v326, 97
      %v564 = vpop.permute.xlu0 %563
      %vm565 = vcmask 793600
      %v566 = vsel %vm565, %v548, %v550
      %v567 = vsel %vm565, %v550, %v552
      %v568 = vsel %vm565, %v552, %v554
      %v569 = vsel %vm565, %v554, %v556
      %v570 = vsel %vm565, %v556, %v558
      %v571 = vsel %vm565, %v558, %v560
      %v572 = vsel %vm565, %v560, %v562
      %v573 = vsel %vm565, %v562, %v564
      %v575 = vsel %vm354, %v280, 0
      %v578 = vsel %vm358, %v566, 0
      %v581 = vsel %vm358, %v567, 0
      %v584 = vsel %vm358, %v568, 0
      %v587 = vsel %vm358, %v569, 0
      %v590 = vsel %vm358, %v570, 0
      %v593 = vsel %vm358, %v571, 0
      %v596 = vsel %vm358, %v572, 0
      %v599 = vsel %vm358, %v573, 0
      %601 = vmatprep.subr.bf16.mxu0 0
      %602 = vmatpush1.bf16.msra.mxu0 0
      %603 = vmatprep.subr.bf16.mxu0 0
      %604 = vmatpush1.bf16.msra.mxu0 0
      %605 = vmatprep.subr.bf16.mxu0 0
      %606 = vmatpush1.bf16.msra.mxu0 0
      %607 = vmatprep.subr.bf16.mxu0 0
      %608 = vmatpush1.bf16.msra.mxu0 0
      %609 = vmatprep.subr.bf16.mxu0 0
      %610 = vmatpush1.bf16.msra.mxu0 0
      %611 = vmatprep.subr.bf16.mxu0 0
      %612 = vmatpush1.bf16.msra.mxu0 0
      %613 = vmatprep.subr.bf16.mxu0 0
      %614 = vmatpush1.bf16.msra.mxu0 0
      %615 = vmatprep.subr.bf16.mxu0 %v581
      %616 = vmatpush1.bf16.msra.mxu0 %v578
      %617 = vmatprep.subr.bf16.mxu0 0
      %618 = vmatpush2.bf16.msra.mxu0 0
      %619 = vmatprep.subr.bf16.mxu0 0
      %620 = vmatpush2.bf16.msra.mxu0 0
      %621 = vmatprep.subr.bf16.mxu0 0
      %622 = vmatpush2.bf16.msra.mxu0 0
      %623 = vmatprep.subr.bf16.mxu0 0
      %624 = vmatpush2.bf16.msra.mxu0 0
      %625 = vmatprep.subr.bf16.mxu0 0
      %626 = vmatpush2.bf16.msra.mxu0 0
      %627 = vmatprep.subr.bf16.mxu0 0
      %628 = vmatpush2.bf16.msra.mxu0 0
      %629 = vmatprep.subr.bf16.mxu0 0
      %630 = vmatpush2.bf16.msra.mxu0 0
      %631 = vmatprep.subr.bf16.mxu0 0
      %632 = vmatpush2.bf16.msra.mxu0 0
      %633 = vmatprep.mubr.bf16.mxu0 0
      %634 = vmatmul.mubr.bf16.gmra.mxu0 %v575
      %v635 = vpop.f32.mrf.mxu0
      %v636 = vadd.f32 %v418, %v635
      %v637 = vpop.f32.mrf.mxu0
      %v638 = vadd.f32 %v420, %v637
      %v639 = vpop.f32.mrf.mxu0
      %v640 = vpop.f32.mrf.mxu0
      %641 = vdwg.mxu0
      %642 = vmatprep.subr.bf16.mxu0 0
      %643 = vmatpush1.bf16.msra.mxu0 0
      %644 = vmatprep.subr.bf16.mxu0 0
      %645 = vmatpush1.bf16.msra.mxu0 0
      %646 = vmatprep.subr.bf16.mxu0 0
      %647 = vmatpush1.bf16.msra.mxu0 0
      %648 = vmatprep.subr.bf16.mxu0 0
      %649 = vmatpush1.bf16.msra.mxu0 0
      %650 = vmatprep.subr.bf16.mxu0 0
      %651 = vmatpush1.bf16.msra.mxu0 0
      %652 = vmatprep.subr.bf16.mxu0 0
      %653 = vmatpush1.bf16.msra.mxu0 0
      %654 = vmatprep.subr.bf16.mxu0 0
      %655 = vmatpush1.bf16.msra.mxu0 0
      %656 = vmatprep.subr.bf16.mxu0 %v587
      %657 = vmatpush1.bf16.msra.mxu0 %v584
      %658 = vmatprep.subr.bf16.mxu0 0
      %659 = vmatpush2.bf16.msra.mxu0 0
      %660 = vmatprep.subr.bf16.mxu0 0
      %661 = vmatpush2.bf16.msra.mxu0 0
      %662 = vmatprep.subr.bf16.mxu0 0
      %663 = vmatpush2.bf16.msra.mxu0 0
      %664 = vmatprep.subr.bf16.mxu0 0
      %665 = vmatpush2.bf16.msra.mxu0 0
      %666 = vmatprep.subr.bf16.mxu0 0
      %667 = vmatpush2.bf16.msra.mxu0 0
      %668 = vmatprep.subr.bf16.mxu0 0
      %669 = vmatpush2.bf16.msra.mxu0 0
      %670 = vmatprep.subr.bf16.mxu0 0
      %671 = vmatpush2.bf16.msra.mxu0 0
      %672 = vmatprep.subr.bf16.mxu0 0
      %673 = vmatpush2.bf16.msra.mxu0 0
      %674 = vmatprep.mubr.bf16.mxu0 0
      %675 = vmatmul.mubr.bf16.gmra.mxu0 %v575
      %v676 = vpop.f32.mrf.mxu0
      %v677 = vadd.f32 %v459, %v676
      %v678 = vpop.f32.mrf.mxu0
      %v679 = vadd.f32 %v461, %v678
      %v680 = vpop.f32.mrf.mxu0
      %v681 = vpop.f32.mrf.mxu0
      %682 = vdwg.mxu0
      %683 = vmatprep.subr.bf16.mxu0 0
      %684 = vmatpush1.bf16.msra.mxu0 0
      %685 = vmatprep.subr.bf16.mxu0 0
      %686 = vmatpush1.bf16.msra.mxu0 0
      %687 = vmatprep.subr.bf16.mxu0 0
      %688 = vmatpush1.bf16.msra.mxu0 0
      %689 = vmatprep.subr.bf16.mxu0 0
      %690 = vmatpush1.bf16.msra.mxu0 0
      %691 = vmatprep.subr.bf16.mxu0 0
      %692 = vmatpush1.bf16.msra.mxu0 0
      %693 = vmatprep.subr.bf16.mxu0 0
      %694 = vmatpush1.bf16.msra.mxu0 0
      %695 = vmatprep.subr.bf16.mxu0 0
      %696 = vmatpush1.bf16.msra.mxu0 0
      %697 = vmatprep.subr.bf16.mxu0 %v593
      %698 = vmatpush1.bf16.msra.mxu0 %v590
      %699 = vmatprep.subr.bf16.mxu0 0
      %700 = vmatpush2.bf16.msra.mxu0 0
      %701 = vmatprep.subr.bf16.mxu0 0
      %702 = vmatpush2.bf16.msra.mxu0 0
      %703 = vmatprep.subr.bf16.mxu0 0
      %704 = vmatpush2.bf16.msra.mxu0 0
      %705 = vmatprep.subr.bf16.mxu0 0
      %706 = vmatpush2.bf16.msra.mxu0 0
      %707 = vmatprep.subr.bf16.mxu0 0
      %708 = vmatpush2.bf16.msra.mxu0 0
      %709 = vmatprep.subr.bf16.mxu0 0
      %710 = vmatpush2.bf16.msra.mxu0 0
      %711 = vmatprep.subr.bf16.mxu0 0
      %712 = vmatpush2.bf16.msra.mxu0 0
      %713 = vmatprep.subr.bf16.mxu0 0
      %714 = vmatpush2.bf16.msra.mxu0 0
      %715 = vmatprep.mubr.bf16.mxu0 0
      %716 = vmatmul.mubr.bf16.gmra.mxu0 %v575
      %v717 = vpop.f32.mrf.mxu0
      %v718 = vadd.f32 %v500, %v717
      %v719 = vpop.f32.mrf.mxu0
      %v720 = vadd.f32 %v502, %v719
      %v721 = vpop.f32.mrf.mxu0
      %v722 = vpop.f32.mrf.mxu0
      %723 = vdwg.mxu0
      %724 = vmatprep.subr.bf16.mxu0 0
      %725 = vmatpush1.bf16.msra.mxu0 0
      %726 = vmatprep.subr.bf16.mxu0 0
      %727 = vmatpush1.bf16.msra.mxu0 0
      %728 = vmatprep.subr.bf16.mxu0 0
      %729 = vmatpush1.bf16.msra.mxu0 0
      %730 = vmatprep.subr.bf16.mxu0 0
      %731 = vmatpush1.bf16.msra.mxu0 0
      %732 = vmatprep.subr.bf16.mxu0 0
      %733 = vmatpush1.bf16.msra.mxu0 0
      %734 = vmatprep.subr.bf16.mxu0 0
      %735 = vmatpush1.bf16.msra.mxu0 0
      %736 = vmatprep.subr.bf16.mxu0 0
      %737 = vmatpush1.bf16.msra.mxu0 0
      %738 = vmatprep.subr.bf16.mxu0 %v599
      %739 = vmatpush1.bf16.msra.mxu0 %v596
      %740 = vmatprep.subr.bf16.mxu0 0
      %741 = vmatpush2.bf16.msra.mxu0 0
      %742 = vmatprep.subr.bf16.mxu0 0
      %743 = vmatpush2.bf16.msra.mxu0 0
      %744 = vmatprep.subr.bf16.mxu0 0
      %745 = vmatpush2.bf16.msra.mxu0 0
      %746 = vmatprep.subr.bf16.mxu0 0
      %747 = vmatpush2.bf16.msra.mxu0 0
      %748 = vmatprep.subr.bf16.mxu0 0
      %749 = vmatpush2.bf16.msra.mxu0 0
      %750 = vmatprep.subr.bf16.mxu0 0
      %751 = vmatpush2.bf16.msra.mxu0 0
      %752 = vmatprep.subr.bf16.mxu0 0
      %753 = vmatpush2.bf16.msra.mxu0 0
      %754 = vmatprep.subr.bf16.mxu0 0
      %755 = vmatpush2.bf16.msra.mxu0 0
      %756 = vmatprep.mubr.bf16.mxu0 0
      %757 = vmatmul.mubr.bf16.gmra.mxu0 %v575
      %v758 = vpop.f32.mrf.mxu0
      %v759 = vadd.f32 %v541, %v758
      %v760 = vpop.f32.mrf.mxu0
      %v761 = vadd.f32 %v543, %v760
      %v762 = vpop.f32.mrf.mxu0
      %v763 = vpop.f32.mrf.mxu0
      %764 = vdwg.mxu0
      %v765 = vld [vmem:[%s165] sm:$0xff]
      %v766 = vld [vmem:[%s165 + $0x8] sm:$0xff]
      %v767 = vld [vmem:[%s165 + $0x10] sm:$0x3]
      %s768 = scalar_lea.vmem %s1, 12
      %v769 = vld [vmem:[%s768] sm:$0x3]
      %v773 = vcombine.high %v765, %v765
      %v775 = vunpack.c.l.s4 1983009808
      %v776 = vunpack.c.0.s8 %v775
      %v777 = vlaneseq
      %v778 = vshrl.u32 %v777, 7
      %v779 = vsub.s32 %v776, %v778
      %v780 = vrot.slane %v765, %v779
      %v782 = vunpack.c.l.s4 1983009808
      %v783 = vunpack.c.0.s8 %v782
      %v784 = vlaneseq
      %v785 = vshrl.u32 %v784, 7
      %v786 = vsub.s32 %v783, %v785
      %v787 = vrot.slane %v773, %v786
      %v788 = vcombine.high %v780, %v780
      %v789 = vcombine.high %v787, %v787
      %v790 = vcombine.high %v766, %v766
      %v792 = vunpack.c.l.s4 1983009808
      %v793 = vunpack.c.0.s8 %v792
      %v794 = vlaneseq
      %v795 = vshrl.u32 %v794, 7
      %v796 = vsub.s32 %v793, %v795
      %v797 = vrot.slane %v766, %v796
      %v799 = vunpack.c.l.s4 1983009808
      %v800 = vunpack.c.0.s8 %v799
      %v801 = vlaneseq
      %v802 = vshrl.u32 %v801, 7
      %v803 = vsub.s32 %v800, %v802
      %v804 = vrot.slane %v790, %v803
      %v805 = vcombine.high %v797, %v797
      %v806 = vcombine.high %v804, %v804
      %v808 = vunpack.c.l.s4 1983009808
      %v809 = vunpack.c.0.s8 %v808
      %v810 = vlaneseq
      %v811 = vshrl.u32 %v810, 7
      %v812 = vsub.s32 %v809, %v811
      %v813 = vrot.slane %v767, %v812
      %814 = vrot.lane.b32.xlu0 %v780, 33
      %v815 = vpop.permute.xlu0 %814
      %816 = vrot.lane.b32.xlu0 %v788, 33
      %v817 = vpop.permute.xlu0 %816
      %818 = vrot.lane.b32.xlu0 %v787, 33
      %v819 = vpop.permute.xlu0 %818
      %820 = vrot.lane.b32.xlu0 %v789, 33
      %v821 = vpop.permute.xlu0 %820
      %822 = vrot.lane.b32.xlu0 %v797, 33
      %v823 = vpop.permute.xlu0 %822
      %824 = vrot.lane.b32.xlu0 %v805, 33
      %v825 = vpop.permute.xlu0 %824
      %826 = vrot.lane.b32.xlu0 %v804, 33
      %v827 = vpop.permute.xlu0 %826
      %828 = vrot.lane.b32.xlu0 %v806, 33
      %v829 = vpop.permute.xlu0 %828
      %830 = vrot.lane.b32.xlu0 %v813, 33
      %v831 = vpop.permute.xlu0 %830
      %vm832 = vcmask 269312
      %v833 = vsel %vm832, %v815, %v817
      %v834 = vsel %vm832, %v817, %v819
      %v835 = vsel %vm832, %v819, %v821
      %v836 = vsel %vm832, %v821, %v823
      %v837 = vsel %vm832, %v823, %v825
      %v838 = vsel %vm832, %v825, %v827
      %v839 = vsel %vm832, %v827, %v829
      %v840 = vsel %vm832, %v829, %v831
      %v842 = vsel %vm354, %v769, 0
      %v845 = vsel %vm358, %v833, 0
      %v848 = vsel %vm358, %v834, 0
      %v851 = vsel %vm358, %v835, 0
      %v854 = vsel %vm358, %v836, 0
      %v857 = vsel %vm358, %v837, 0
      %v860 = vsel %vm358, %v838, 0
      %v863 = vsel %vm358, %v839, 0
      %v866 = vsel %vm358, %v840, 0
      %868 = vmatprep.subr.bf16.mxu0 0
      %869 = vmatpush1.bf16.msra.mxu0 0
      %870 = vmatprep.subr.bf16.mxu0 0
      %871 = vmatpush1.bf16.msra.mxu0 0
      %872 = vmatprep.subr.bf16.mxu0 0
      %873 = vmatpush1.bf16.msra.mxu0 0
      %874 = vmatprep.subr.bf16.mxu0 0
      %875 = vmatpush1.bf16.msra.mxu0 0
      %876 = vmatprep.subr.bf16.mxu0 0
      %877 = vmatpush1.bf16.msra.mxu0 0
      %878 = vmatprep.subr.bf16.mxu0 0
      %879 = vmatpush1.bf16.msra.mxu0 0
      %880 = vmatprep.subr.bf16.mxu0 0
      %881 = vmatpush1.bf16.msra.mxu0 0
      %882 = vmatprep.subr.bf16.mxu0 %v848
      %883 = vmatpush1.bf16.msra.mxu0 %v845
      %884 = vmatprep.subr.bf16.mxu0 0
      %885 = vmatpush2.bf16.msra.mxu0 0
      %886 = vmatprep.subr.bf16.mxu0 0
      %887 = vmatpush2.bf16.msra.mxu0 0
      %888 = vmatprep.subr.bf16.mxu0 0
      %889 = vmatpush2.bf16.msra.mxu0 0
      %890 = vmatprep.subr.bf16.mxu0 0
      %891 = vmatpush2.bf16.msra.mxu0 0
      %892 = vmatprep.subr.bf16.mxu0 0
      %893 = vmatpush2.bf16.msra.mxu0 0
      %894 = vmatprep.subr.bf16.mxu0 0
      %895 = vmatpush2.bf16.msra.mxu0 0
      %896 = vmatprep.subr.bf16.mxu0 0
      %897 = vmatpush2.bf16.msra.mxu0 0
      %898 = vmatprep.subr.bf16.mxu0 0
      %899 = vmatpush2.bf16.msra.mxu0 0
      %900 = vmatprep.mubr.bf16.mxu0 0
      %901 = vmatmul.mubr.bf16.gmra.mxu0 %v842
      %v902 = vpop.f32.mrf.mxu0
      %v903 = vadd.f32 0.0, %v902
      %v904 = vpop.f32.mrf.mxu0
      %v905 = vadd.f32 0.0, %v904
      %v906 = vpop.f32.mrf.mxu0
      %v907 = vpop.f32.mrf.mxu0
      %908 = vdwg.mxu0
      %909 = vmatprep.subr.bf16.mxu0 0
      %910 = vmatpush1.bf16.msra.mxu0 0
      %911 = vmatprep.subr.bf16.mxu0 0
      %912 = vmatpush1.bf16.msra.mxu0 0
      %913 = vmatprep.subr.bf16.mxu0 0
      %914 = vmatpush1.bf16.msra.mxu0 0
      %915 = vmatprep.subr.bf16.mxu0 0
      %916 = vmatpush1.bf16.msra.mxu0 0
      %917 = vmatprep.subr.bf16.mxu0 0
      %918 = vmatpush1.bf16.msra.mxu0 0
      %919 = vmatprep.subr.bf16.mxu0 0
      %920 = vmatpush1.bf16.msra.mxu0 0
      %921 = vmatprep.subr.bf16.mxu0 0
      %922 = vmatpush1.bf16.msra.mxu0 0
      %923 = vmatprep.subr.bf16.mxu0 %v854
      %924 = vmatpush1.bf16.msra.mxu0 %v851
      %925 = vmatprep.subr.bf16.mxu0 0
      %926 = vmatpush2.bf16.msra.mxu0 0
      %927 = vmatprep.subr.bf16.mxu0 0
      %928 = vmatpush2.bf16.msra.mxu0 0
      %929 = vmatprep.subr.bf16.mxu0 0
      %930 = vmatpush2.bf16.msra.mxu0 0
      %931 = vmatprep.subr.bf16.mxu0 0
      %932 = vmatpush2.bf16.msra.mxu0 0
      %933 = vmatprep.subr.bf16.mxu0 0
      %934 = vmatpush2.bf16.msra.mxu0 0
      %935 = vmatprep.subr.bf16.mxu0 0
      %936 = vmatpush2.bf16.msra.mxu0 0
      %937 = vmatprep.subr.bf16.mxu0 0
      %938 = vmatpush2.bf16.msra.mxu0 0
      %939 = vmatprep.subr.bf16.mxu0 0
      %940 = vmatpush2.bf16.msra.mxu0 0
      %941 = vmatprep.mubr.bf16.mxu0 0
      %942 = vmatmul.mubr.bf16.gmra.mxu0 %v842
      %v943 = vpop.f32.mrf.mxu0
      %v944 = vadd.f32 0.0, %v943
      %v945 = vpop.f32.mrf.mxu0
      %v946 = vadd.f32 0.0, %v945
      %v947 = vpop.f32.mrf.mxu0
      %v948 = vpop.f32.mrf.mxu0
      %949 = vdwg.mxu0
      %950 = vmatprep.subr.bf16.mxu0 0
      %951 = vmatpush1.bf16.msra.mxu0 0
      %952 = vmatprep.subr.bf16.mxu0 0
      %953 = vmatpush1.bf16.msra.mxu0 0
      %954 = vmatprep.subr.bf16.mxu0 0
      %955 = vmatpush1.bf16.msra.mxu0 0
      %956 = vmatprep.subr.bf16.mxu0 0
      %957 = vmatpush1.bf16.msra.mxu0 0
      %958 = vmatprep.subr.bf16.mxu0 0
      %959 = vmatpush1.bf16.msra.mxu0 0
      %960 = vmatprep.subr.bf16.mxu0 0
      %961 = vmatpush1.bf16.msra.mxu0 0
      %962 = vmatprep.subr.bf16.mxu0 0
      %963 = vmatpush1.bf16.msra.mxu0 0
      %964 = vmatprep.subr.bf16.mxu0 %v860
      %965 = vmatpush1.bf16.msra.mxu0 %v857
      %966 = vmatprep.subr.bf16.mxu0 0
      %967 = vmatpush2.bf16.msra.mxu0 0
      %968 = vmatprep.subr.bf16.mxu0 0
      %969 = vmatpush2.bf16.msra.mxu0 0
      %970 = vmatprep.subr.bf16.mxu0 0
      %971 = vmatpush2.bf16.msra.mxu0 0
      %972 = vmatprep.subr.bf16.mxu0 0
      %973 = vmatpush2.bf16.msra.mxu0 0
      %974 = vmatprep.subr.bf16.mxu0 0
      %975 = vmatpush2.bf16.msra.mxu0 0
      %976 = vmatprep.subr.bf16.mxu0 0
      %977 = vmatpush2.bf16.msra.mxu0 0
      %978 = vmatprep.subr.bf16.mxu0 0
      %979 = vmatpush2.bf16.msra.mxu0 0
      %980 = vmatprep.subr.bf16.mxu0 0
      %981 = vmatpush2.bf16.msra.mxu0 0
      %982 = vmatprep.mubr.bf16.mxu0 0
      %983 = vmatmul.mubr.bf16.gmra.mxu0 %v842
      %v984 = vpop.f32.mrf.mxu0
      %v985 = vadd.f32 0.0, %v984
      %v986 = vpop.f32.mrf.mxu0
      %v987 = vadd.f32 0.0, %v986
      %v988 = vpop.f32.mrf.mxu0
      %v989 = vpop.f32.mrf.mxu0
      %990 = vdwg.mxu0
      %991 = vmatprep.subr.bf16.mxu0 0
      %992 = vmatpush1.bf16.msra.mxu0 0
      %993 = vmatprep.subr.bf16.mxu0 0
      %994 = vmatpush1.bf16.msra.mxu0 0
      %995 = vmatprep.subr.bf16.mxu0 0
      %996 = vmatpush1.bf16.msra.mxu0 0
      %997 = vmatprep.subr.bf16.mxu0 0
      %998 = vmatpush1.bf16.msra.mxu0 0
      %999 = vmatprep.subr.bf16.mxu0 0
      %1000 = vmatpush1.bf16.msra.mxu0 0
      %1001 = vmatprep.subr.bf16.mxu0 0
      %1002 = vmatpush1.bf16.msra.mxu0 0
      %1003 = vmatprep.subr.bf16.mxu0 0
      %1004 = vmatpush1.bf16.msra.mxu0 0
      %1005 = vmatprep.subr.bf16.mxu0 %v866
      %1006 = vmatpush1.bf16.msra.mxu0 %v863
      %1007 = vmatprep.subr.bf16.mxu0 0
      %1008 = vmatpush2.bf16.msra.mxu0 0
      %1009 = vmatprep.subr.bf16.mxu0 0
      %1010 = vmatpush2.bf16.msra.mxu0 0
      %1011 = vmatprep.subr.bf16.mxu0 0
      %1012 = vmatpush2.bf16.msra.mxu0 0
      %1013 = vmatprep.subr.bf16.mxu0 0
      %1014 = vmatpush2.bf16.msra.mxu0 0
      %1015 = vmatprep.subr.bf16.mxu0 0
      %1016 = vmatpush2.bf16.msra.mxu0 0
      %1017 = vmatprep.subr.bf16.mxu0 0
      %1018 = vmatpush2.bf16.msra.mxu0 0
      %1019 = vmatprep.subr.bf16.mxu0 0
      %1020 = vmatpush2.bf16.msra.mxu0 0
      %1021 = vmatprep.subr.bf16.mxu0 0
      %1022 = vmatpush2.bf16.msra.mxu0 0
      %1023 = vmatprep.mubr.bf16.mxu0 0
      %1024 = vmatmul.mubr.bf16.gmra.mxu0 %v842
      %v1025 = vpop.f32.mrf.mxu0
      %v1026 = vadd.f32 0.0, %v1025
      %v1027 = vpop.f32.mrf.mxu0
      %v1028 = vadd.f32 0.0, %v1027
      %v1029 = vpop.f32.mrf.mxu0
      %v1030 = vpop.f32.mrf.mxu0
      %1031 = vdwg.mxu0
      %v1032 = vadd.f32 %v636, %v903
      %v1033 = vadd.f32 %v638, %v905
      %v1034 = vadd.f32 %v677, %v944
      %v1035 = vadd.f32 %v679, %v946
      %v1036 = vadd.f32 %v718, %v985
      %v1037 = vadd.f32 %v720, %v987
      %v1038 = vadd.f32 %v759, %v1026
      %v1039 = vadd.f32 %v761, %v1028
      %vm1040 = vcmp.ge.s32.totalorder %v269, 1
      %vm1041 = vcmp.ge.s32.totalorder %v270, 1
      %vm1042 = vcmp.ge.s32.totalorder %v271, 1
      %vm1043 = vcmp.ge.s32.totalorder %v272, 1
      %vm1044 = vcmp.ge.s32.totalorder %v273, 1
      %vm1045 = vcmp.ge.s32.totalorder %v274, 1
      %vm1046 = vcmp.ge.s32.totalorder %v275, 1
      %vm1047 = vcmp.ge.s32.totalorder %v276, 1
      %v1048 = vsel %vm1040, 1, 0
      %v1049 = vsel %vm1041, 1, 0
      %v1050 = vsel %vm1042, 1, 0
      %v1051 = vsel %vm1043, 1, 0
      %v1052 = vsel %vm1044, 1, 0
      %v1053 = vsel %vm1045, 1, 0
      %v1054 = vsel %vm1046, 1, 0
      %v1055 = vsel %vm1047, 1, 0
      %vm1056 = vcmp.eq.s32.totalorder %v1048, 1
      %vm1057 = vcmp.eq.s32.totalorder %v1049, 1
      %vm1058 = vcmp.eq.s32.totalorder %v1050, 1
      %vm1059 = vcmp.eq.s32.totalorder %v1051, 1
      %vm1060 = vcmp.eq.s32.totalorder %v1052, 1
      %vm1061 = vcmp.eq.s32.totalorder %v1053, 1
      %vm1062 = vcmp.eq.s32.totalorder %v1054, 1
      %vm1063 = vcmp.eq.s32.totalorder %v1055, 1
      %v1064 = vsel %vm1056, %v1032, 0.0
      %v1065 = vsel %vm1057, %v1033, 0.0
      %v1066 = vsel %vm1058, %v1034, 0.0
      %v1067 = vsel %vm1059, %v1035, 0.0
      %v1068 = vsel %vm1060, %v1036, 0.0
      %v1069 = vsel %vm1061, %v1037, 0.0
      %v1070 = vsel %vm1062, %v1038, 0.0
      %v1071 = vsel %vm1063, %v1039, 0.0
      %v1072 = vadd.f32 %v1064, 0.0
      %v1073 = vadd.f32 %v1065, 0.0
      %v1074 = vadd.f32 %v1066, 0.0
      %v1075 = vadd.f32 %v1067, 0.0
      %v1076 = vadd.f32 %v1068, 0.0
      %v1077 = vadd.f32 %v1069, 0.0
      %v1078 = vadd.f32 %v1070, 0.0
      %v1079 = vadd.f32 %v1071, 0.0
      %v1080 = vld [vmem:[%s165] sm:$0xff]
      %v1081 = vld [vmem:[%s165 + $0x8] sm:$0xff]
      %v1082 = vld [vmem:[%s165 + $0x10] sm:$0x3]
      %s1083 = scalar_lea.vmem %s1, 2
      %v1084 = vld [vmem:[%s1083] sm:$0x3]
      %s1085 = scalar_lea.vmem %s1, 8
      %v1086 = vld [vmem:[%s1085] sm:$0x3]
      %v1090 = vcombine.high %v1080, %v1080
      %v1092 = vunpack.c.l.s4 1983009808
      %v1093 = vunpack.c.0.s8 %v1092
      %v1094 = vlaneseq
      %v1095 = vshrl.u32 %v1094, 7
      %v1096 = vsub.s32 %v1093, %v1095
      %v1097 = vrot.slane %v1080, %v1096
      %v1099 = vunpack.c.l.s4 1983009808
      %v1100 = vunpack.c.0.s8 %v1099
      %v1101 = vlaneseq
      %v1102 = vshrl.u32 %v1101, 7
      %v1103 = vsub.s32 %v1100, %v1102
      %v1104 = vrot.slane %v1090, %v1103
      %v1105 = vcombine.high %v1097, %v1097
      %v1106 = vcombine.high %v1104, %v1104
      %v1107 = vcombine.high %v1081, %v1081
      %v1109 = vunpack.c.l.s4 1983009808
      %v1110 = vunpack.c.0.s8 %v1109
      %v1111 = vlaneseq
      %v1112 = vshrl.u32 %v1111, 7
      %v1113 = vsub.s32 %v1110, %v1112
      %v1114 = vrot.slane %v1081, %v1113
      %v1116 = vunpack.c.l.s4 1983009808
      %v1117 = vunpack.c.0.s8 %v1116
      %v1118 = vlaneseq
      %v1119 = vshrl.u32 %v1118, 7
      %v1120 = vsub.s32 %v1117, %v1119
      %v1121 = vrot.slane %v1107, %v1120
      %v1122 = vcombine.high %v1114, %v1114
      %v1123 = vcombine.high %v1121, %v1121
      %v1125 = vunpack.c.l.s4 1983009808
      %v1126 = vunpack.c.0.s8 %v1125
      %v1127 = vlaneseq
      %v1128 = vshrl.u32 %v1127, 7
      %v1129 = vsub.s32 %v1126, %v1128
      %v1130 = vrot.slane %v1082, %v1129
      %1131 = vrot.lane.b32.xlu0 %v1097, 64
      %v1132 = vpop.permute.xlu0 %1131
      %1133 = vrot.lane.b32.xlu0 %v1105, 64
      %v1134 = vpop.permute.xlu0 %1133
      %1135 = vrot.lane.b32.xlu0 %v1104, 64
      %v1136 = vpop.permute.xlu0 %1135
      %1137 = vrot.lane.b32.xlu0 %v1106, 64
      %v1138 = vpop.permute.xlu0 %1137
      %1139 = vrot.lane.b32.xlu0 %v1114, 64
      %v1140 = vpop.permute.xlu0 %1139
      %1141 = vrot.lane.b32.xlu0 %v1122, 64
      %v1142 = vpop.permute.xlu0 %1141
      %1143 = vrot.lane.b32.xlu0 %v1121, 64
      %v1144 = vpop.permute.xlu0 %1143
      %1145 = vrot.lane.b32.xlu0 %v1123, 64
      %v1146 = vpop.permute.xlu0 %1145
      %1147 = vrot.lane.b32.xlu0 %v1130, 64
      %v1148 = vpop.permute.xlu0 %1147
      %vm1149 = vcmask 523264
      %v1150 = vsel %vm1149, %v1132, %v1134
      %v1151 = vsel %vm1149, %v1134, %v1136
      %v1152 = vsel %vm1149, %v1136, %v1138
      %v1153 = vsel %vm1149, %v1138, %v1140
      %v1154 = vsel %vm1149, %v1140, %v1142
      %v1155 = vsel %vm1149, %v1142, %v1144
      %v1156 = vsel %vm1149, %v1144, %v1146
      %v1157 = vsel %vm1149, %v1146, %v1148
      %v1159 = vsel %vm354, %v1086, 0
      %v1162 = vsel %vm358, %v1150, 0
      %v1165 = vsel %vm358, %v1151, 0
      %v1168 = vsel %vm358, %v1152, 0
      %v1171 = vsel %vm358, %v1153, 0
      %v1174 = vsel %vm358, %v1154, 0
      %v1177 = vsel %vm358, %v1155, 0
      %v1180 = vsel %vm358, %v1156, 0
      %v1183 = vsel %vm358, %v1157, 0
      %1185 = vmatprep.subr.bf16.mxu0 0
      %1186 = vmatpush1.bf16.msra.mxu0 0
      %1187 = vmatprep.subr.bf16.mxu0 0
      %1188 = vmatpush1.bf16.msra.mxu0 0
      %1189 = vmatprep.subr.bf16.mxu0 0
      %1190 = vmatpush1.bf16.msra.mxu0 0
      %1191 = vmatprep.subr.bf16.mxu0 0
      %1192 = vmatpush1.bf16.msra.mxu0 0
      %1193 = vmatprep.subr.bf16.mxu0 0
      %1194 = vmatpush1.bf16.msra.mxu0 0
      %1195 = vmatprep.subr.bf16.mxu0 0
      %1196 = vmatpush1.bf16.msra.mxu0 0
      %1197 = vmatprep.subr.bf16.mxu0 0
      %1198 = vmatpush1.bf16.msra.mxu0 0
      %1199 = vmatprep.subr.bf16.mxu0 %v1165
      %1200 = vmatpush1.bf16.msra.mxu0 %v1162
      %1201 = vmatprep.subr.bf16.mxu0 0
      %1202 = vmatpush2.bf16.msra.mxu0 0
      %1203 = vmatprep.subr.bf16.mxu0 0
      %1204 = vmatpush2.bf16.msra.mxu0 0
      %1205 = vmatprep.subr.bf16.mxu0 0
      %1206 = vmatpush2.bf16.msra.mxu0 0
      %1207 = vmatprep.subr.bf16.mxu0 0
      %1208 = vmatpush2.bf16.msra.mxu0 0
      %1209 = vmatprep.subr.bf16.mxu0 0
      %1210 = vmatpush2.bf16.msra.mxu0 0
      %1211 = vmatprep.subr.bf16.mxu0 0
      %1212 = vmatpush2.bf16.msra.mxu0 0
      %1213 = vmatprep.subr.bf16.mxu0 0
      %1214 = vmatpush2.bf16.msra.mxu0 0
      %1215 = vmatprep.subr.bf16.mxu0 0
      %1216 = vmatpush2.bf16.msra.mxu0 0
      %1217 = vmatprep.mubr.bf16.mxu0 0
      %1218 = vmatmul.mubr.bf16.gmra.mxu0 %v1159
      %v1219 = vpop.f32.mrf.mxu0
      %v1220 = vadd.f32 0.0, %v1219
      %v1221 = vpop.f32.mrf.mxu0
      %v1222 = vadd.f32 0.0, %v1221
      %v1223 = vpop.f32.mrf.mxu0
      %v1224 = vpop.f32.mrf.mxu0
      %1225 = vdwg.mxu0
      %1226 = vmatprep.subr.bf16.mxu0 0
      %1227 = vmatpush1.bf16.msra.mxu0 0
      %1228 = vmatprep.subr.bf16.mxu0 0
      %1229 = vmatpush1.bf16.msra.mxu0 0
      %1230 = vmatprep.subr.bf16.mxu0 0
      %1231 = vmatpush1.bf16.msra.mxu0 0
      %1232 = vmatprep.subr.bf16.mxu0 0
      %1233 = vmatpush1.bf16.msra.mxu0 0
      %1234 = vmatprep.subr.bf16.mxu0 0
      %1235 = vmatpush1.bf16.msra.mxu0 0
      %1236 = vmatprep.subr.bf16.mxu0 0
      %1237 = vmatpush1.bf16.msra.mxu0 0
      %1238 = vmatprep.subr.bf16.mxu0 0
      %1239 = vmatpush1.bf16.msra.mxu0 0
      %1240 = vmatprep.subr.bf16.mxu0 %v1171
      %1241 = vmatpush1.bf16.msra.mxu0 %v1168
      %1242 = vmatprep.subr.bf16.mxu0 0
      %1243 = vmatpush2.bf16.msra.mxu0 0
      %1244 = vmatprep.subr.bf16.mxu0 0
      %1245 = vmatpush2.bf16.msra.mxu0 0
      %1246 = vmatprep.subr.bf16.mxu0 0
      %1247 = vmatpush2.bf16.msra.mxu0 0
      %1248 = vmatprep.subr.bf16.mxu0 0
      %1249 = vmatpush2.bf16.msra.mxu0 0
      %1250 = vmatprep.subr.bf16.mxu0 0
      %1251 = vmatpush2.bf16.msra.mxu0 0
      %1252 = vmatprep.subr.bf16.mxu0 0
      %1253 = vmatpush2.bf16.msra.mxu0 0
      %1254 = vmatprep.subr.bf16.mxu0 0
      %1255 = vmatpush2.bf16.msra.mxu0 0
      %1256 = vmatprep.subr.bf16.mxu0 0
      %1257 = vmatpush2.bf16.msra.mxu0 0
      %1258 = vmatprep.mubr.bf16.mxu0 0
      %1259 = vmatmul.mubr.bf16.gmra.mxu0 %v1159
      %v1260 = vpop.f32.mrf.mxu0
      %v1261 = vadd.f32 0.0, %v1260
      %v1262 = vpop.f32.mrf.mxu0
      %v1263 = vadd.f32 0.0, %v1262
      %v1264 = vpop.f32.mrf.mxu0
      %v1265 = vpop.f32.mrf.mxu0
      %1266 = vdwg.mxu0
      %1267 = vmatprep.subr.bf16.mxu0 0
      %1268 = vmatpush1.bf16.msra.mxu0 0
      %1269 = vmatprep.subr.bf16.mxu0 0
      %1270 = vmatpush1.bf16.msra.mxu0 0
      %1271 = vmatprep.subr.bf16.mxu0 0
      %1272 = vmatpush1.bf16.msra.mxu0 0
      %1273 = vmatprep.subr.bf16.mxu0 0
      %1274 = vmatpush1.bf16.msra.mxu0 0
      %1275 = vmatprep.subr.bf16.mxu0 0
      %1276 = vmatpush1.bf16.msra.mxu0 0
      %1277 = vmatprep.subr.bf16.mxu0 0
      %1278 = vmatpush1.bf16.msra.mxu0 0
      %1279 = vmatprep.subr.bf16.mxu0 0
      %1280 = vmatpush1.bf16.msra.mxu0 0
      %1281 = vmatprep.subr.bf16.mxu0 %v1177
      %1282 = vmatpush1.bf16.msra.mxu0 %v1174
      %1283 = vmatprep.subr.bf16.mxu0 0
      %1284 = vmatpush2.bf16.msra.mxu0 0
      %1285 = vmatprep.subr.bf16.mxu0 0
      %1286 = vmatpush2.bf16.msra.mxu0 0
      %1287 = vmatprep.subr.bf16.mxu0 0
      %1288 = vmatpush2.bf16.msra.mxu0 0
      %1289 = vmatprep.subr.bf16.mxu0 0
      %1290 = vmatpush2.bf16.msra.mxu0 0
      %1291 = vmatprep.subr.bf16.mxu0 0
      %1292 = vmatpush2.bf16.msra.mxu0 0
      %1293 = vmatprep.subr.bf16.mxu0 0
      %1294 = vmatpush2.bf16.msra.mxu0 0
      %1295 = vmatprep.subr.bf16.mxu0 0
      %1296 = vmatpush2.bf16.msra.mxu0 0
      %1297 = vmatprep.subr.bf16.mxu0 0
      %1298 = vmatpush2.bf16.msra.mxu0 0
      %1299 = vmatprep.mubr.bf16.mxu0 0
      %1300 = vmatmul.mubr.bf16.gmra.mxu0 %v1159
      %v1301 = vpop.f32.mrf.mxu0
      %v1302 = vadd.f32 0.0, %v1301
      %v1303 = vpop.f32.mrf.mxu0
      %v1304 = vadd.f32 0.0, %v1303
      %v1305 = vpop.f32.mrf.mxu0
      %v1306 = vpop.f32.mrf.mxu0
      %1307 = vdwg.mxu0
      %1308 = vmatprep.subr.bf16.mxu0 0
      %1309 = vmatpush1.bf16.msra.mxu0 0
      %1310 = vmatprep.subr.bf16.mxu0 0
      %1311 = vmatpush1.bf16.msra.mxu0 0
      %1312 = vmatprep.subr.bf16.mxu0 0
      %1313 = vmatpush1.bf16.msra.mxu0 0
      %1314 = vmatprep.subr.bf16.mxu0 0
      %1315 = vmatpush1.bf16.msra.mxu0 0
      %1316 = vmatprep.subr.bf16.mxu0 0
      %1317 = vmatpush1.bf16.msra.mxu0 0
      %1318 = vmatprep.subr.bf16.mxu0 0
      %1319 = vmatpush1.bf16.msra.mxu0 0
      %1320 = vmatprep.subr.bf16.mxu0 0
      %1321 = vmatpush1.bf16.msra.mxu0 0
      %1322 = vmatprep.subr.bf16.mxu0 %v1183
      %1323 = vmatpush1.bf16.msra.mxu0 %v1180
      %1324 = vmatprep.subr.bf16.mxu0 0
      %1325 = vmatpush2.bf16.msra.mxu0 0
      %1326 = vmatprep.subr.bf16.mxu0 0
      %1327 = vmatpush2.bf16.msra.mxu0 0
      %1328 = vmatprep.subr.bf16.mxu0 0
      %1329 = vmatpush2.bf16.msra.mxu0 0
      %1330 = vmatprep.subr.bf16.mxu0 0
      %1331 = vmatpush2.bf16.msra.mxu0 0
      %1332 = vmatprep.subr.bf16.mxu0 0
      %1333 = vmatpush2.bf16.msra.mxu0 0
      %1334 = vmatprep.subr.bf16.mxu0 0
      %1335 = vmatpush2.bf16.msra.mxu0 0
      %1336 = vmatprep.subr.bf16.mxu0 0
      %1337 = vmatpush2.bf16.msra.mxu0 0
      %1338 = vmatprep.subr.bf16.mxu0 0
      %1339 = vmatpush2.bf16.msra.mxu0 0
      %1340 = vmatprep.mubr.bf16.mxu0 0
      %1341 = vmatmul.mubr.bf16.gmra.mxu0 %v1159
      %v1342 = vpop.f32.mrf.mxu0
      %v1343 = vadd.f32 0.0, %v1342
      %v1344 = vpop.f32.mrf.mxu0
      %v1345 = vadd.f32 0.0, %v1344
      %v1346 = vpop.f32.mrf.mxu0
      %v1347 = vpop.f32.mrf.mxu0
      %1348 = vdwg.mxu0
      %1349 = vrot.lane.b32.xlu0 %v1097, 96
      %v1350 = vpop.permute.xlu0 %1349
      %1351 = vrot.lane.b32.xlu0 %v1105, 96
      %v1352 = vpop.permute.xlu0 %1351
      %1353 = vrot.lane.b32.xlu0 %v1104, 96
      %v1354 = vpop.permute.xlu0 %1353
      %1355 = vrot.lane.b32.xlu0 %v1106, 96
      %v1356 = vpop.permute.xlu0 %1355
      %1357 = vrot.lane.b32.xlu0 %v1114, 96
      %v1358 = vpop.permute.xlu0 %1357
      %1359 = vrot.lane.b32.xlu0 %v1122, 96
      %v1360 = vpop.permute.xlu0 %1359
      %1361 = vrot.lane.b32.xlu0 %v1121, 96
      %v1362 = vpop.permute.xlu0 %1361
      %1363 = vrot.lane.b32.xlu0 %v1123, 96
      %v1364 = vpop.permute.xlu0 %1363
      %1365 = vrot.lane.b32.xlu0 %v1130, 96
      %v1366 = vpop.permute.xlu0 %1365
      %vm1367 = vcmask 785408
      %v1368 = vsel %vm1367, %v1350, %v1352
      %v1369 = vsel %vm1367, %v1352, %v1354
      %v1370 = vsel %vm1367, %v1354, %v1356
      %v1371 = vsel %vm1367, %v1356, %v1358
      %v1372 = vsel %vm1367, %v1358, %v1360
      %v1373 = vsel %vm1367, %v1360, %v1362
      %v1374 = vsel %vm1367, %v1362, %v1364
      %v1375 = vsel %vm1367, %v1364, %v1366
      %v1377 = vsel %vm354, %v1084, 0
      %v1380 = vsel %vm358, %v1368, 0
      %v1383 = vsel %vm358, %v1369, 0
      %v1386 = vsel %vm358, %v1370, 0
      %v1389 = vsel %vm358, %v1371, 0
      %v1392 = vsel %vm358, %v1372, 0
      %v1395 = vsel %vm358, %v1373, 0
      %v1398 = vsel %vm358, %v1374, 0
      %v1401 = vsel %vm358, %v1375, 0
      %1403 = vmatprep.subr.bf16.mxu0 0
      %1404 = vmatpush1.bf16.msra.mxu0 0
      %1405 = vmatprep.subr.bf16.mxu0 0
      %1406 = vmatpush1.bf16.msra.mxu0 0
      %1407 = vmatprep.subr.bf16.mxu0 0
      %1408 = vmatpush1.bf16.msra.mxu0 0
      %1409 = vmatprep.subr.bf16.mxu0 0
      %1410 = vmatpush1.bf16.msra.mxu0 0
      %1411 = vmatprep.subr.bf16.mxu0 0
      %1412 = vmatpush1.bf16.msra.mxu0 0
      %1413 = vmatprep.subr.bf16.mxu0 0
      %1414 = vmatpush1.bf16.msra.mxu0 0
      %1415 = vmatprep.subr.bf16.mxu0 0
      %1416 = vmatpush1.bf16.msra.mxu0 0
      %1417 = vmatprep.subr.bf16.mxu0 %v1383
      %1418 = vmatpush1.bf16.msra.mxu0 %v1380
      %1419 = vmatprep.subr.bf16.mxu0 0
      %1420 = vmatpush2.bf16.msra.mxu0 0
      %1421 = vmatprep.subr.bf16.mxu0 0
      %1422 = vmatpush2.bf16.msra.mxu0 0
      %1423 = vmatprep.subr.bf16.mxu0 0
      %1424 = vmatpush2.bf16.msra.mxu0 0
      %1425 = vmatprep.subr.bf16.mxu0 0
      %1426 = vmatpush2.bf16.msra.mxu0 0
      %1427 = vmatprep.subr.bf16.mxu0 0
      %1428 = vmatpush2.bf16.msra.mxu0 0
      %1429 = vmatprep.subr.bf16.mxu0 0
      %1430 = vmatpush2.bf16.msra.mxu0 0
      %1431 = vmatprep.subr.bf16.mxu0 0
      %1432 = vmatpush2.bf16.msra.mxu0 0
      %1433 = vmatprep.subr.bf16.mxu0 0
      %1434 = vmatpush2.bf16.msra.mxu0 0
      %1435 = vmatprep.mubr.bf16.mxu0 0
      %1436 = vmatmul.mubr.bf16.gmra.mxu0 %v1377
      %v1437 = vpop.f32.mrf.mxu0
      %v1438 = vadd.f32 %v1220, %v1437
      %v1439 = vpop.f32.mrf.mxu0
      %v1440 = vadd.f32 %v1222, %v1439
      %v1441 = vpop.f32.mrf.mxu0
      %v1442 = vpop.f32.mrf.mxu0
      %1443 = vdwg.mxu0
      %1444 = vmatprep.subr.bf16.mxu0 0
      %1445 = vmatpush1.bf16.msra.mxu0 0
      %1446 = vmatprep.subr.bf16.mxu0 0
      %1447 = vmatpush1.bf16.msra.mxu0 0
      %1448 = vmatprep.subr.bf16.mxu0 0
      %1449 = vmatpush1.bf16.msra.mxu0 0
      %1450 = vmatprep.subr.bf16.mxu0 0
      %1451 = vmatpush1.bf16.msra.mxu0 0
      %1452 = vmatprep.subr.bf16.mxu0 0
      %1453 = vmatpush1.bf16.msra.mxu0 0
      %1454 = vmatprep.subr.bf16.mxu0 0
      %1455 = vmatpush1.bf16.msra.mxu0 0
      %1456 = vmatprep.subr.bf16.mxu0 0
      %1457 = vmatpush1.bf16.msra.mxu0 0
      %1458 = vmatprep.subr.bf16.mxu0 %v1389
      %1459 = vmatpush1.bf16.msra.mxu0 %v1386
      %1460 = vmatprep.subr.bf16.mxu0 0
      %1461 = vmatpush2.bf16.msra.mxu0 0
      %1462 = vmatprep.subr.bf16.mxu0 0
      %1463 = vmatpush2.bf16.msra.mxu0 0
      %1464 = vmatprep.subr.bf16.mxu0 0
      %1465 = vmatpush2.bf16.msra.mxu0 0
      %1466 = vmatprep.subr.bf16.mxu0 0
      %1467 = vmatpush2.bf16.msra.mxu0 0
      %1468 = vmatprep.subr.bf16.mxu0 0
      %1469 = vmatpush2.bf16.msra.mxu0 0
      %1470 = vmatprep.subr.bf16.mxu0 0
      %1471 = vmatpush2.bf16.msra.mxu0 0
      %1472 = vmatprep.subr.bf16.mxu0 0
      %1473 = vmatpush2.bf16.msra.mxu0 0
      %1474 = vmatprep.subr.bf16.mxu0 0
      %1475 = vmatpush2.bf16.msra.mxu0 0
      %1476 = vmatprep.mubr.bf16.mxu0 0
      %1477 = vmatmul.mubr.bf16.gmra.mxu0 %v1377
      %v1478 = vpop.f32.mrf.mxu0
      %v1479 = vadd.f32 %v1261, %v1478
      %v1480 = vpop.f32.mrf.mxu0
      %v1481 = vadd.f32 %v1263, %v1480
      %v1482 = vpop.f32.mrf.mxu0
      %v1483 = vpop.f32.mrf.mxu0
      %1484 = vdwg.mxu0
      %1485 = vmatprep.subr.bf16.mxu0 0
      %1486 = vmatpush1.bf16.msra.mxu0 0
      %1487 = vmatprep.subr.bf16.mxu0 0
      %1488 = vmatpush1.bf16.msra.mxu0 0
      %1489 = vmatprep.subr.bf16.mxu0 0
      %1490 = vmatpush1.bf16.msra.mxu0 0
      %1491 = vmatprep.subr.bf16.mxu0 0
      %1492 = vmatpush1.bf16.msra.mxu0 0
      %1493 = vmatprep.subr.bf16.mxu0 0
      %1494 = vmatpush1.bf16.msra.mxu0 0
      %1495 = vmatprep.subr.bf16.mxu0 0
      %1496 = vmatpush1.bf16.msra.mxu0 0
      %1497 = vmatprep.subr.bf16.mxu0 0
      %1498 = vmatpush1.bf16.msra.mxu0 0
      %1499 = vmatprep.subr.bf16.mxu0 %v1395
      %1500 = vmatpush1.bf16.msra.mxu0 %v1392
      %1501 = vmatprep.subr.bf16.mxu0 0
      %1502 = vmatpush2.bf16.msra.mxu0 0
      %1503 = vmatprep.subr.bf16.mxu0 0
      %1504 = vmatpush2.bf16.msra.mxu0 0
      %1505 = vmatprep.subr.bf16.mxu0 0
      %1506 = vmatpush2.bf16.msra.mxu0 0
      %1507 = vmatprep.subr.bf16.mxu0 0
      %1508 = vmatpush2.bf16.msra.mxu0 0
      %1509 = vmatprep.subr.bf16.mxu0 0
      %1510 = vmatpush2.bf16.msra.mxu0 0
      %1511 = vmatprep.subr.bf16.mxu0 0
      %1512 = vmatpush2.bf16.msra.mxu0 0
      %1513 = vmatprep.subr.bf16.mxu0 0
      %1514 = vmatpush2.bf16.msra.mxu0 0
      %1515 = vmatprep.subr.bf16.mxu0 0
      %1516 = vmatpush2.bf16.msra.mxu0 0
      %1517 = vmatprep.mubr.bf16.mxu0 0
      %1518 = vmatmul.mubr.bf16.gmra.mxu0 %v1377
      %v1519 = vpop.f32.mrf.mxu0
      %v1520 = vadd.f32 %v1302, %v1519
      %v1521 = vpop.f32.mrf.mxu0
      %v1522 = vadd.f32 %v1304, %v1521
      %v1523 = vpop.f32.mrf.mxu0
      %v1524 = vpop.f32.mrf.mxu0
      %1525 = vdwg.mxu0
      %1526 = vmatprep.subr.bf16.mxu0 0
      %1527 = vmatpush1.bf16.msra.mxu0 0
      %1528 = vmatprep.subr.bf16.mxu0 0
      %1529 = vmatpush1.bf16.msra.mxu0 0
      %1530 = vmatprep.subr.bf16.mxu0 0
      %1531 = vmatpush1.bf16.msra.mxu0 0
      %1532 = vmatprep.subr.bf16.mxu0 0
      %1533 = vmatpush1.bf16.msra.mxu0 0
      %1534 = vmatprep.subr.bf16.mxu0 0
      %1535 = vmatpush1.bf16.msra.mxu0 0
      %1536 = vmatprep.subr.bf16.mxu0 0
      %1537 = vmatpush1.bf16.msra.mxu0 0
      %1538 = vmatprep.subr.bf16.mxu0 0
      %1539 = vmatpush1.bf16.msra.mxu0 0
      %1540 = vmatprep.subr.bf16.mxu0 %v1401
      %1541 = vmatpush1.bf16.msra.mxu0 %v1398
      %1542 = vmatprep.subr.bf16.mxu0 0
      %1543 = vmatpush2.bf16.msra.mxu0 0
      %1544 = vmatprep.subr.bf16.mxu0 0
      %1545 = vmatpush2.bf16.msra.mxu0 0
      %1546 = vmatprep.subr.bf16.mxu0 0
      %1547 = vmatpush2.bf16.msra.mxu0 0
      %1548 = vmatprep.subr.bf16.mxu0 0
      %1549 = vmatpush2.bf16.msra.mxu0 0
      %1550 = vmatprep.subr.bf16.mxu0 0
      %1551 = vmatpush2.bf16.msra.mxu0 0
      %1552 = vmatprep.subr.bf16.mxu0 0
      %1553 = vmatpush2.bf16.msra.mxu0 0
      %1554 = vmatprep.subr.bf16.mxu0 0
      %1555 = vmatpush2.bf16.msra.mxu0 0
      %1556 = vmatprep.subr.bf16.mxu0 0
      %1557 = vmatpush2.bf16.msra.mxu0 0
      %1558 = vmatprep.mubr.bf16.mxu0 0
      %1559 = vmatmul.mubr.bf16.gmra.mxu0 %v1377
      %v1560 = vpop.f32.mrf.mxu0
      %v1561 = vadd.f32 %v1343, %v1560
      %v1562 = vpop.f32.mrf.mxu0
      %v1563 = vadd.f32 %v1345, %v1562
      %v1564 = vpop.f32.mrf.mxu0
      %v1565 = vpop.f32.mrf.mxu0
      %1566 = vdwg.mxu0
      %v1567 = vld [vmem:[%s165] sm:$0xff]
      %v1568 = vld [vmem:[%s165 + $0x8] sm:$0xff]
      %v1569 = vld [vmem:[%s165 + $0x10] sm:$0x3]
      %s1570 = scalar_lea.vmem %s1, 14
      %v1571 = vld [vmem:[%s1570] sm:$0x3]
      %v1575 = vcombine.high %v1567, %v1567
      %v1577 = vunpack.c.l.s4 1983009808
      %v1578 = vunpack.c.0.s8 %v1577
      %v1579 = vlaneseq
      %v1580 = vshrl.u32 %v1579, 7
      %v1581 = vsub.s32 %v1578, %v1580
      %v1582 = vrot.slane %v1567, %v1581
      %v1584 = vunpack.c.l.s4 1983009808
      %v1585 = vunpack.c.0.s8 %v1584
      %v1586 = vlaneseq
      %v1587 = vshrl.u32 %v1586, 7
      %v1588 = vsub.s32 %v1585, %v1587
      %v1589 = vrot.slane %v1575, %v1588
      %v1590 = vcombine.high %v1582, %v1582
      %v1591 = vcombine.high %v1589, %v1589
      %v1592 = vcombine.high %v1568, %v1568
      %v1594 = vunpack.c.l.s4 1983009808
      %v1595 = vunpack.c.0.s8 %v1594
      %v1596 = vlaneseq
      %v1597 = vshrl.u32 %v1596, 7
      %v1598 = vsub.s32 %v1595, %v1597
      %v1599 = vrot.slane %v1568, %v1598
      %v1601 = vunpack.c.l.s4 1983009808
      %v1602 = vunpack.c.0.s8 %v1601
      %v1603 = vlaneseq
      %v1604 = vshrl.u32 %v1603, 7
      %v1605 = vsub.s32 %v1602, %v1604
      %v1606 = vrot.slane %v1592, %v1605
      %v1607 = vcombine.high %v1599, %v1599
      %v1608 = vcombine.high %v1606, %v1606
      %v1610 = vunpack.c.l.s4 1983009808
      %v1611 = vunpack.c.0.s8 %v1610
      %v1612 = vlaneseq
      %v1613 = vshrl.u32 %v1612, 7
      %v1614 = vsub.s32 %v1611, %v1613
      %v1615 = vrot.slane %v1569, %v1614
      %1616 = vrot.lane.b32.xlu0 %v1582, 32
      %v1617 = vpop.permute.xlu0 %1616
      %1618 = vrot.lane.b32.xlu0 %v1590, 32
      %v1619 = vpop.permute.xlu0 %1618
      %1620 = vrot.lane.b32.xlu0 %v1589, 32
      %v1621 = vpop.permute.xlu0 %1620
      %1622 = vrot.lane.b32.xlu0 %v1591, 32
      %v1623 = vpop.permute.xlu0 %1622
      %1624 = vrot.lane.b32.xlu0 %v1599, 32
      %v1625 = vpop.permute.xlu0 %1624
      %1626 = vrot.lane.b32.xlu0 %v1607, 32
      %v1627 = vpop.permute.xlu0 %1626
      %1628 = vrot.lane.b32.xlu0 %v1606, 32
      %v1629 = vpop.permute.xlu0 %1628
      %1630 = vrot.lane.b32.xlu0 %v1608, 32
      %v1631 = vpop.permute.xlu0 %1630
      %1632 = vrot.lane.b32.xlu0 %v1615, 32
      %v1633 = vpop.permute.xlu0 %1632
      %vm1634 = vcmask 261120
      %v1635 = vsel %vm1634, %v1617, %v1619
      %v1636 = vsel %vm1634, %v1619, %v1621
      %v1637 = vsel %vm1634, %v1621, %v1623
      %v1638 = vsel %vm1634, %v1623, %v1625
      %v1639 = vsel %vm1634, %v1625, %v1627
      %v1640 = vsel %vm1634, %v1627, %v1629
      %v1641 = vsel %vm1634, %v1629, %v1631
      %v1642 = vsel %vm1634, %v1631, %v1633
      %v1644 = vsel %vm354, %v1571, 0
      %v1647 = vsel %vm358, %v1635, 0
      %v1650 = vsel %vm358, %v1636, 0
      %v1653 = vsel %vm358, %v1637, 0
      %v1656 = vsel %vm358, %v1638, 0
      %v1659 = vsel %vm358, %v1639, 0
      %v1662 = vsel %vm358, %v1640, 0
      %v1665 = vsel %vm358, %v1641, 0
      %v1668 = vsel %vm358, %v1642, 0
      %1670 = vmatprep.subr.bf16.mxu0 0
      %1671 = vmatpush1.bf16.msra.mxu0 0
      %1672 = vmatprep.subr.bf16.mxu0 0
      %1673 = vmatpush1.bf16.msra.mxu0 0
      %1674 = vmatprep.subr.bf16.mxu0 0
      %1675 = vmatpush1.bf16.msra.mxu0 0
      %1676 = vmatprep.subr.bf16.mxu0 0
      %1677 = vmatpush1.bf16.msra.mxu0 0
      %1678 = vmatprep.subr.bf16.mxu0 0
      %1679 = vmatpush1.bf16.msra.mxu0 0
      %1680 = vmatprep.subr.bf16.mxu0 0
      %1681 = vmatpush1.bf16.msra.mxu0 0
      %1682 = vmatprep.subr.bf16.mxu0 0
      %1683 = vmatpush1.bf16.msra.mxu0 0
      %1684 = vmatprep.subr.bf16.mxu0 %v1650
      %1685 = vmatpush1.bf16.msra.mxu0 %v1647
      %1686 = vmatprep.subr.bf16.mxu0 0
      %1687 = vmatpush2.bf16.msra.mxu0 0
      %1688 = vmatprep.subr.bf16.mxu0 0
      %1689 = vmatpush2.bf16.msra.mxu0 0
      %1690 = vmatprep.subr.bf16.mxu0 0
      %1691 = vmatpush2.bf16.msra.mxu0 0
      %1692 = vmatprep.subr.bf16.mxu0 0
      %1693 = vmatpush2.bf16.msra.mxu0 0
      %1694 = vmatprep.subr.bf16.mxu0 0
      %1695 = vmatpush2.bf16.msra.mxu0 0
      %1696 = vmatprep.subr.bf16.mxu0 0
      %1697 = vmatpush2.bf16.msra.mxu0 0
      %1698 = vmatprep.subr.bf16.mxu0 0
      %1699 = vmatpush2.bf16.msra.mxu0 0
      %1700 = vmatprep.subr.bf16.mxu0 0
      %1701 = vmatpush2.bf16.msra.mxu0 0
      %1702 = vmatprep.mubr.bf16.mxu0 0
      %1703 = vmatmul.mubr.bf16.gmra.mxu0 %v1644
      %v1704 = vpop.f32.mrf.mxu0
      %v1705 = vadd.f32 0.0, %v1704
      %v1706 = vpop.f32.mrf.mxu0
      %v1707 = vadd.f32 0.0, %v1706
      %v1708 = vpop.f32.mrf.mxu0
      %v1709 = vpop.f32.mrf.mxu0
      %1710 = vdwg.mxu0
      %1711 = vmatprep.subr.bf16.mxu0 0
      %1712 = vmatpush1.bf16.msra.mxu0 0
      %1713 = vmatprep.subr.bf16.mxu0 0
      %1714 = vmatpush1.bf16.msra.mxu0 0
      %1715 = vmatprep.subr.bf16.mxu0 0
      %1716 = vmatpush1.bf16.msra.mxu0 0
      %1717 = vmatprep.subr.bf16.mxu0 0
      %1718 = vmatpush1.bf16.msra.mxu0 0
      %1719 = vmatprep.subr.bf16.mxu0 0
      %1720 = vmatpush1.bf16.msra.mxu0 0
      %1721 = vmatprep.subr.bf16.mxu0 0
      %1722 = vmatpush1.bf16.msra.mxu0 0
      %1723 = vmatprep.subr.bf16.mxu0 0
      %1724 = vmatpush1.bf16.msra.mxu0 0
      %1725 = vmatprep.subr.bf16.mxu0 %v1656
      %1726 = vmatpush1.bf16.msra.mxu0 %v1653
      %1727 = vmatprep.subr.bf16.mxu0 0
      %1728 = vmatpush2.bf16.msra.mxu0 0
      %1729 = vmatprep.subr.bf16.mxu0 0
      %1730 = vmatpush2.bf16.msra.mxu0 0
      %1731 = vmatprep.subr.bf16.mxu0 0
      %1732 = vmatpush2.bf16.msra.mxu0 0
      %1733 = vmatprep.subr.bf16.mxu0 0
      %1734 = vmatpush2.bf16.msra.mxu0 0
      %1735 = vmatprep.subr.bf16.mxu0 0
      %1736 = vmatpush2.bf16.msra.mxu0 0
      %1737 = vmatprep.subr.bf16.mxu0 0
      %1738 = vmatpush2.bf16.msra.mxu0 0
      %1739 = vmatprep.subr.bf16.mxu0 0
      %1740 = vmatpush2.bf16.msra.mxu0 0
      %1741 = vmatprep.subr.bf16.mxu0 0
      %1742 = vmatpush2.bf16.msra.mxu0 0
      %1743 = vmatprep.mubr.bf16.mxu0 0
      %1744 = vmatmul.mubr.bf16.gmra.mxu0 %v1644
      %v1745 = vpop.f32.mrf.mxu0
      %v1746 = vadd.f32 0.0, %v1745
      %v1747 = vpop.f32.mrf.mxu0
      %v1748 = vadd.f32 0.0, %v1747
      %v1749 = vpop.f32.mrf.mxu0
      %v1750 = vpop.f32.mrf.mxu0
      %1751 = vdwg.mxu0
      %1752 = vmatprep.subr.bf16.mxu0 0
      %1753 = vmatpush1.bf16.msra.mxu0 0
      %1754 = vmatprep.subr.bf16.mxu0 0
      %1755 = vmatpush1.bf16.msra.mxu0 0
      %1756 = vmatprep.subr.bf16.mxu0 0
      %1757 = vmatpush1.bf16.msra.mxu0 0
      %1758 = vmatprep.subr.bf16.mxu0 0
      %1759 = vmatpush1.bf16.msra.mxu0 0
      %1760 = vmatprep.subr.bf16.mxu0 0
      %1761 = vmatpush1.bf16.msra.mxu0 0
      %1762 = vmatprep.subr.bf16.mxu0 0
      %1763 = vmatpush1.bf16.msra.mxu0 0
      %1764 = vmatprep.subr.bf16.mxu0 0
      %1765 = vmatpush1.bf16.msra.mxu0 0
      %1766 = vmatprep.subr.bf16.mxu0 %v1662
      %1767 = vmatpush1.bf16.msra.mxu0 %v1659
      %1768 = vmatprep.subr.bf16.mxu0 0
      %1769 = vmatpush2.bf16.msra.mxu0 0
      %1770 = vmatprep.subr.bf16.mxu0 0
      %1771 = vmatpush2.bf16.msra.mxu0 0
      %1772 = vmatprep.subr.bf16.mxu0 0
      %1773 = vmatpush2.bf16.msra.mxu0 0
      %1774 = vmatprep.subr.bf16.mxu0 0
      %1775 = vmatpush2.bf16.msra.mxu0 0
      %1776 = vmatprep.subr.bf16.mxu0 0
      %1777 = vmatpush2.bf16.msra.mxu0 0
      %1778 = vmatprep.subr.bf16.mxu0 0
      %1779 = vmatpush2.bf16.msra.mxu0 0
      %1780 = vmatprep.subr.bf16.mxu0 0
      %1781 = vmatpush2.bf16.msra.mxu0 0
      %1782 = vmatprep.subr.bf16.mxu0 0
      %1783 = vmatpush2.bf16.msra.mxu0 0
      %1784 = vmatprep.mubr.bf16.mxu0 0
      %1785 = vmatmul.mubr.bf16.gmra.mxu0 %v1644
      %v1786 = vpop.f32.mrf.mxu0
      %v1787 = vadd.f32 0.0, %v1786
      %v1788 = vpop.f32.mrf.mxu0
      %v1789 = vadd.f32 0.0, %v1788
      %v1790 = vpop.f32.mrf.mxu0
      %v1791 = vpop.f32.mrf.mxu0
      %1792 = vdwg.mxu0
      %1793 = vmatprep.subr.bf16.mxu0 0
      %1794 = vmatpush1.bf16.msra.mxu0 0
      %1795 = vmatprep.subr.bf16.mxu0 0
      %1796 = vmatpush1.bf16.msra.mxu0 0
      %1797 = vmatprep.subr.bf16.mxu0 0
      %1798 = vmatpush1.bf16.msra.mxu0 0
      %1799 = vmatprep.subr.bf16.mxu0 0
      %1800 = vmatpush1.bf16.msra.mxu0 0
      %1801 = vmatprep.subr.bf16.mxu0 0
      %1802 = vmatpush1.bf16.msra.mxu0 0
      %1803 = vmatprep.subr.bf16.mxu0 0
      %1804 = vmatpush1.bf16.msra.mxu0 0
      %1805 = vmatprep.subr.bf16.mxu0 0
      %1806 = vmatpush1.bf16.msra.mxu0 0
      %1807 = vmatprep.subr.bf16.mxu0 %v1668
      %1808 = vmatpush1.bf16.msra.mxu0 %v1665
      %1809 = vmatprep.subr.bf16.mxu0 0
      %1810 = vmatpush2.bf16.msra.mxu0 0
      %1811 = vmatprep.subr.bf16.mxu0 0
      %1812 = vmatpush2.bf16.msra.mxu0 0
      %1813 = vmatprep.subr.bf16.mxu0 0
      %1814 = vmatpush2.bf16.msra.mxu0 0
      %1815 = vmatprep.subr.bf16.mxu0 0
      %1816 = vmatpush2.bf16.msra.mxu0 0
      %1817 = vmatprep.subr.bf16.mxu0 0
      %1818 = vmatpush2.bf16.msra.mxu0 0
      %1819 = vmatprep.subr.bf16.mxu0 0
      %1820 = vmatpush2.bf16.msra.mxu0 0
      %1821 = vmatprep.subr.bf16.mxu0 0
      %1822 = vmatpush2.bf16.msra.mxu0 0
      %1823 = vmatprep.subr.bf16.mxu0 0
      %1824 = vmatpush2.bf16.msra.mxu0 0
      %1825 = vmatprep.mubr.bf16.mxu0 0
      %1826 = vmatmul.mubr.bf16.gmra.mxu0 %v1644
      %v1827 = vpop.f32.mrf.mxu0
      %v1828 = vadd.f32 0.0, %v1827
      %v1829 = vpop.f32.mrf.mxu0
      %v1830 = vadd.f32 0.0, %v1829
      %v1831 = vpop.f32.mrf.mxu0
      %v1832 = vpop.f32.mrf.mxu0
      %1833 = vdwg.mxu0
      %v1834 = vadd.f32 %v1438, %v1705
      %v1835 = vadd.f32 %v1440, %v1707
      %v1836 = vadd.f32 %v1479, %v1746
      %v1837 = vadd.f32 %v1481, %v1748
      %v1838 = vadd.f32 %v1520, %v1787
      %v1839 = vadd.f32 %v1522, %v1789
      %v1840 = vadd.f32 %v1561, %v1828
      %v1841 = vadd.f32 %v1563, %v1830
      %v1842 = vadd.f32 %v1072, %v1834
      %v1843 = vadd.f32 %v1073, %v1835
      %v1844 = vadd.f32 %v1074, %v1836
      %v1845 = vadd.f32 %v1075, %v1837
      %v1846 = vadd.f32 %v1076, %v1838
      %v1847 = vadd.f32 %v1077, %v1839
      %v1848 = vadd.f32 %v1078, %v1840
      %v1849 = vadd.f32 %v1079, %v1841
      %v1850 = vld [vmem:[%s165] sm:$0xff]
      %v1851 = vld [vmem:[%s165 + $0x8] sm:$0xff]
      %v1852 = vld [vmem:[%s165 + $0x10] sm:$0x3]
      %s1853 = scalar_lea.vmem %s1, 4
      %v1854 = vld [vmem:[%s1853] sm:$0x3]
      %s1855 = scalar_lea.vmem %s1, 10
      %v1856 = vld [vmem:[%s1855] sm:$0x3]
      %v1860 = vcombine.high %v1850, %v1850
      %v1862 = vunpack.c.l.s4 1983009808
      %v1863 = vunpack.c.0.s8 %v1862
      %v1864 = vlaneseq
      %v1865 = vshrl.u32 %v1864, 7
      %v1866 = vsub.s32 %v1863, %v1865
      %v1867 = vrot.slane %v1850, %v1866
      %v1869 = vunpack.c.l.s4 1983009808
      %v1870 = vunpack.c.0.s8 %v1869
      %v1871 = vlaneseq
      %v1872 = vshrl.u32 %v1871, 7
      %v1873 = vsub.s32 %v1870, %v1872
      %v1874 = vrot.slane %v1860, %v1873
      %v1875 = vcombine.high %v1867, %v1867
      %v1876 = vcombine.high %v1874, %v1874
      %v1877 = vcombine.high %v1851, %v1851
      %v1879 = vunpack.c.l.s4 1983009808
      %v1880 = vunpack.c.0.s8 %v1879
      %v1881 = vlaneseq
      %v1882 = vshrl.u32 %v1881, 7
      %v1883 = vsub.s32 %v1880, %v1882
      %v1884 = vrot.slane %v1851, %v1883
      %v1886 = vunpack.c.l.s4 1983009808
      %v1887 = vunpack.c.0.s8 %v1886
      %v1888 = vlaneseq
      %v1889 = vshrl.u32 %v1888, 7
      %v1890 = vsub.s32 %v1887, %v1889
      %v1891 = vrot.slane %v1877, %v1890
      %v1892 = vcombine.high %v1884, %v1884
      %v1893 = vcombine.high %v1891, %v1891
      %v1895 = vunpack.c.l.s4 1983009808
      %v1896 = vunpack.c.0.s8 %v1895
      %v1897 = vlaneseq
      %v1898 = vshrl.u32 %v1897, 7
      %v1899 = vsub.s32 %v1896, %v1898
      %v1900 = vrot.slane %v1852, %v1899
      %1901 = vrot.lane.b32.xlu0 %v1867, 63
      %v1902 = vpop.permute.xlu0 %1901
      %1903 = vrot.lane.b32.xlu0 %v1875, 63
      %v1904 = vpop.permute.xlu0 %1903
      %1905 = vrot.lane.b32.xlu0 %v1874, 63
      %v1906 = vpop.permute.xlu0 %1905
      %1907 = vrot.lane.b32.xlu0 %v1876, 63
      %v1908 = vpop.permute.xlu0 %1907
      %1909 = vrot.lane.b32.xlu0 %v1884, 63
      %v1910 = vpop.permute.xlu0 %1909
      %1911 = vrot.lane.b32.xlu0 %v1892, 63
      %v1912 = vpop.permute.xlu0 %1911
      %1913 = vrot.lane.b32.xlu0 %v1891, 63
      %v1914 = vpop.permute.xlu0 %1913
      %1915 = vrot.lane.b32.xlu0 %v1893, 63
      %v1916 = vpop.permute.xlu0 %1915
      %1917 = vrot.lane.b32.xlu0 %v1900, 63
      %v1918 = vpop.permute.xlu0 %1917
      %vm1919 = vcmask 515072
      %v1920 = vsel %vm1919, %v1902, %v1904
      %v1921 = vsel %vm1919, %v1904, %v1906
      %v1922 = vsel %vm1919, %v1906, %v1908
      %v1923 = vsel %vm1919, %v1908, %v1910
      %v1924 = vsel %vm1919, %v1910, %v1912
      %v1925 = vsel %vm1919, %v1912, %v1914
      %v1926 = vsel %vm1919, %v1914, %v1916
      %v1927 = vsel %vm1919, %v1916, %v1918
      %v1929 = vsel %vm354, %v1856, 0
      %v1932 = vsel %vm358, %v1920, 0
      %v1935 = vsel %vm358, %v1921, 0
      %v1938 = vsel %vm358, %v1922, 0
      %v1941 = vsel %vm358, %v1923, 0
      %v1944 = vsel %vm358, %v1924, 0
      %v1947 = vsel %vm358, %v1925, 0
      %v1950 = vsel %vm358, %v1926, 0
      %v1953 = vsel %vm358, %v1927, 0
      %1955 = vmatprep.subr.bf16.mxu0 0
      %1956 = vmatpush1.bf16.msra.mxu0 0
      %1957 = vmatprep.subr.bf16.mxu0 0
      %1958 = vmatpush1.bf16.msra.mxu0 0
      %1959 = vmatprep.subr.bf16.mxu0 0
      %1960 = vmatpush1.bf16.msra.mxu0 0
      %1961 = vmatprep.subr.bf16.mxu0 0
      %1962 = vmatpush1.bf16.msra.mxu0 0
      %1963 = vmatprep.subr.bf16.mxu0 0
      %1964 = vmatpush1.bf16.msra.mxu0 0
      %1965 = vmatprep.subr.bf16.mxu0 0
      %1966 = vmatpush1.bf16.msra.mxu0 0
      %1967 = vmatprep.subr.bf16.mxu0 0
      %1968 = vmatpush1.bf16.msra.mxu0 0
      %1969 = vmatprep.subr.bf16.mxu0 %v1935
      %1970 = vmatpush1.bf16.msra.mxu0 %v1932
      %1971 = vmatprep.subr.bf16.mxu0 0
      %1972 = vmatpush2.bf16.msra.mxu0 0
      %1973 = vmatprep.subr.bf16.mxu0 0
      %1974 = vmatpush2.bf16.msra.mxu0 0
      %1975 = vmatprep.subr.bf16.mxu0 0
      %1976 = vmatpush2.bf16.msra.mxu0 0
      %1977 = vmatprep.subr.bf16.mxu0 0
      %1978 = vmatpush2.bf16.msra.mxu0 0
      %1979 = vmatprep.subr.bf16.mxu0 0
      %1980 = vmatpush2.bf16.msra.mxu0 0
      %1981 = vmatprep.subr.bf16.mxu0 0
      %1982 = vmatpush2.bf16.msra.mxu0 0
      %1983 = vmatprep.subr.bf16.mxu0 0
      %1984 = vmatpush2.bf16.msra.mxu0 0
      %1985 = vmatprep.subr.bf16.mxu0 0
      %1986 = vmatpush2.bf16.msra.mxu0 0
      %1987 = vmatprep.mubr.bf16.mxu0 0
      %1988 = vmatmul.mubr.bf16.gmra.mxu0 %v1929
      %v1989 = vpop.f32.mrf.mxu0
      %v1990 = vadd.f32 0.0, %v1989
      %v1991 = vpop.f32.mrf.mxu0
      %v1992 = vadd.f32 0.0, %v1991
      %v1993 = vpop.f32.mrf.mxu0
      %v1994 = vpop.f32.mrf.mxu0
      %1995 = vdwg.mxu0
      %1996 = vmatprep.subr.bf16.mxu0 0
      %1997 = vmatpush1.bf16.msra.mxu0 0
      %1998 = vmatprep.subr.bf16.mxu0 0
      %1999 = vmatpush1.bf16.msra.mxu0 0
      %2000 = vmatprep.subr.bf16.mxu0 0
      %2001 = vmatpush1.bf16.msra.mxu0 0
      %2002 = vmatprep.subr.bf16.mxu0 0
      %2003 = vmatpush1.bf16.msra.mxu0 0
      %2004 = vmatprep.subr.bf16.mxu0 0
      %2005 = vmatpush1.bf16.msra.mxu0 0
      %2006 = vmatprep.subr.bf16.mxu0 0
      %2007 = vmatpush1.bf16.msra.mxu0 0
      %2008 = vmatprep.subr.bf16.mxu0 0
      %2009 = vmatpush1.bf16.msra.mxu0 0
      %2010 = vmatprep.subr.bf16.mxu0 %v1941
      %2011 = vmatpush1.bf16.msra.mxu0 %v1938
      %2012 = vmatprep.subr.bf16.mxu0 0
      %2013 = vmatpush2.bf16.msra.mxu0 0
      %2014 = vmatprep.subr.bf16.mxu0 0
      %2015 = vmatpush2.bf16.msra.mxu0 0
      %2016 = vmatprep.subr.bf16.mxu0 0
      %2017 = vmatpush2.bf16.msra.mxu0 0
      %2018 = vmatprep.subr.bf16.mxu0 0
      %2019 = vmatpush2.bf16.msra.mxu0 0
      %2020 = vmatprep.subr.bf16.mxu0 0
      %2021 = vmatpush2.bf16.msra.mxu0 0
      %2022 = vmatprep.subr.bf16.mxu0 0
      %2023 = vmatpush2.bf16.msra.mxu0 0
      %2024 = vmatprep.subr.bf16.mxu0 0
      %2025 = vmatpush2.bf16.msra.mxu0 0
      %2026 = vmatprep.subr.bf16.mxu0 0
      %2027 = vmatpush2.bf16.msra.mxu0 0
      %2028 = vmatprep.mubr.bf16.mxu0 0
      %2029 = vmatmul.mubr.bf16.gmra.mxu0 %v1929
      %v2030 = vpop.f32.mrf.mxu0
      %v2031 = vadd.f32 0.0, %v2030
      %v2032 = vpop.f32.mrf.mxu0
      %v2033 = vadd.f32 0.0, %v2032
      %v2034 = vpop.f32.mrf.mxu0
      %v2035 = vpop.f32.mrf.mxu0
      %2036 = vdwg.mxu0
      %2037 = vmatprep.subr.bf16.mxu0 0
      %2038 = vmatpush1.bf16.msra.mxu0 0
      %2039 = vmatprep.subr.bf16.mxu0 0
      %2040 = vmatpush1.bf16.msra.mxu0 0
      %2041 = vmatprep.subr.bf16.mxu0 0
      %2042 = vmatpush1.bf16.msra.mxu0 0
      %2043 = vmatprep.subr.bf16.mxu0 0
      %2044 = vmatpush1.bf16.msra.mxu0 0
      %2045 = vmatprep.subr.bf16.mxu0 0
      %2046 = vmatpush1.bf16.msra.mxu0 0
      %2047 = vmatprep.subr.bf16.mxu0 0
      %2048 = vmatpush1.bf16.msra.mxu0 0
      %2049 = vmatprep.subr.bf16.mxu0 0
      %2050 = vmatpush1.bf16.msra.mxu0 0
      %2051 = vmatprep.subr.bf16.mxu0 %v1947
      %2052 = vmatpush1.bf16.msra.mxu0 %v1944
      %2053 = vmatprep.subr.bf16.mxu0 0
      %2054 = vmatpush2.bf16.msra.mxu0 0
      %2055 = vmatprep.subr.bf16.mxu0 0
      %2056 = vmatpush2.bf16.msra.mxu0 0
      %2057 = vmatprep.subr.bf16.mxu0 0
      %2058 = vmatpush2.bf16.msra.mxu0 0
      %2059 = vmatprep.subr.bf16.mxu0 0
      %2060 = vmatpush2.bf16.msra.mxu0 0
      %2061 = vmatprep.subr.bf16.mxu0 0
      %2062 = vmatpush2.bf16.msra.mxu0 0
      %2063 = vmatprep.subr.bf16.mxu0 0
      %2064 = vmatpush2.bf16.msra.mxu0 0
      %2065 = vmatprep.subr.bf16.mxu0 0
      %2066 = vmatpush2.bf16.msra.mxu0 0
      %2067 = vmatprep.subr.bf16.mxu0 0
      %2068 = vmatpush2.bf16.msra.mxu0 0
      %2069 = vmatprep.mubr.bf16.mxu0 0
      %2070 = vmatmul.mubr.bf16.gmra.mxu0 %v1929
      %v2071 = vpop.f32.mrf.mxu0
      %v2072 = vadd.f32 0.0, %v2071
      %v2073 = vpop.f32.mrf.mxu0
      %v2074 = vadd.f32 0.0, %v2073
      %v2075 = vpop.f32.mrf.mxu0
      %v2076 = vpop.f32.mrf.mxu0
      %2077 = vdwg.mxu0
      %2078 = vmatprep.subr.bf16.mxu0 0
      %2079 = vmatpush1.bf16.msra.mxu0 0
      %2080 = vmatprep.subr.bf16.mxu0 0
      %2081 = vmatpush1.bf16.msra.mxu0 0
      %2082 = vmatprep.subr.bf16.mxu0 0
      %2083 = vmatpush1.bf16.msra.mxu0 0
      %2084 = vmatprep.subr.bf16.mxu0 0
      %2085 = vmatpush1.bf16.msra.mxu0 0
      %2086 = vmatprep.subr.bf16.mxu0 0
      %2087 = vmatpush1.bf16.msra.mxu0 0
      %2088 = vmatprep.subr.bf16.mxu0 0
      %2089 = vmatpush1.bf16.msra.mxu0 0
      %2090 = vmatprep.subr.bf16.mxu0 0
      %2091 = vmatpush1.bf16.msra.mxu0 0
      %2092 = vmatprep.subr.bf16.mxu0 %v1953
      %2093 = vmatpush1.bf16.msra.mxu0 %v1950
      %2094 = vmatprep.subr.bf16.mxu0 0
      %2095 = vmatpush2.bf16.msra.mxu0 0
      %2096 = vmatprep.subr.bf16.mxu0 0
      %2097 = vmatpush2.bf16.msra.mxu0 0
      %2098 = vmatprep.subr.bf16.mxu0 0
      %2099 = vmatpush2.bf16.msra.mxu0 0
      %2100 = vmatprep.subr.bf16.mxu0 0
      %2101 = vmatpush2.bf16.msra.mxu0 0
      %2102 = vmatprep.subr.bf16.mxu0 0
      %2103 = vmatpush2.bf16.msra.mxu0 0
      %2104 = vmatprep.subr.bf16.mxu0 0
      %2105 = vmatpush2.bf16.msra.mxu0 0
      %2106 = vmatprep.subr.bf16.mxu0 0
      %2107 = vmatpush2.bf16.msra.mxu0 0
      %2108 = vmatprep.subr.bf16.mxu0 0
      %2109 = vmatpush2.bf16.msra.mxu0 0
      %2110 = vmatprep.mubr.bf16.mxu0 0
      %2111 = vmatmul.mubr.bf16.gmra.mxu0 %v1929
      %v2112 = vpop.f32.mrf.mxu0
      %v2113 = vadd.f32 0.0, %v2112
      %v2114 = vpop.f32.mrf.mxu0
      %v2115 = vadd.f32 0.0, %v2114
      %v2116 = vpop.f32.mrf.mxu0
      %v2117 = vpop.f32.mrf.mxu0
      %2118 = vdwg.mxu0
      %2119 = vrot.lane.b32.xlu0 %v1867, 95
      %v2120 = vpop.permute.xlu0 %2119
      %2121 = vrot.lane.b32.xlu0 %v1875, 95
      %v2122 = vpop.permute.xlu0 %2121
      %2123 = vrot.lane.b32.xlu0 %v1874, 95
      %v2124 = vpop.permute.xlu0 %2123
      %2125 = vrot.lane.b32.xlu0 %v1876, 95
      %v2126 = vpop.permute.xlu0 %2125
      %2127 = vrot.lane.b32.xlu0 %v1884, 95
      %v2128 = vpop.permute.xlu0 %2127
      %2129 = vrot.lane.b32.xlu0 %v1892, 95
      %v2130 = vpop.permute.xlu0 %2129
      %2131 = vrot.lane.b32.xlu0 %v1891, 95
      %v2132 = vpop.permute.xlu0 %2131
      %2133 = vrot.lane.b32.xlu0 %v1893, 95
      %v2134 = vpop.permute.xlu0 %2133
      %2135 = vrot.lane.b32.xlu0 %v1900, 95
      %v2136 = vpop.permute.xlu0 %2135
      %vm2137 = vcmask 777216
      %v2138 = vsel %vm2137, %v2120, %v2122
      %v2139 = vsel %vm2137, %v2122, %v2124
      %v2140 = vsel %vm2137, %v2124, %v2126
      %v2141 = vsel %vm2137, %v2126, %v2128
      %v2142 = vsel %vm2137, %v2128, %v2130
      %v2143 = vsel %vm2137, %v2130, %v2132
      %v2144 = vsel %vm2137, %v2132, %v2134
      %v2145 = vsel %vm2137, %v2134, %v2136
      %v2147 = vsel %vm354, %v1854, 0
      %v2150 = vsel %vm358, %v2138, 0
      %v2153 = vsel %vm358, %v2139, 0
      %v2156 = vsel %vm358, %v2140, 0
      %v2159 = vsel %vm358, %v2141, 0
      %v2162 = vsel %vm358, %v2142, 0
      %v2165 = vsel %vm358, %v2143, 0
      %v2168 = vsel %vm358, %v2144, 0
      %v2171 = vsel %vm358, %v2145, 0
      %2173 = vmatprep.subr.bf16.mxu0 0
      %2174 = vmatpush1.bf16.msra.mxu0 0
      %2175 = vmatprep.subr.bf16.mxu0 0
      %2176 = vmatpush1.bf16.msra.mxu0 0
      %2177 = vmatprep.subr.bf16.mxu0 0
      %2178 = vmatpush1.bf16.msra.mxu0 0
      %2179 = vmatprep.subr.bf16.mxu0 0
      %2180 = vmatpush1.bf16.msra.mxu0 0
      %2181 = vmatprep.subr.bf16.mxu0 0
      %2182 = vmatpush1.bf16.msra.mxu0 0
      %2183 = vmatprep.subr.bf16.mxu0 0
      %2184 = vmatpush1.bf16.msra.mxu0 0
      %2185 = vmatprep.subr.bf16.mxu0 0
      %2186 = vmatpush1.bf16.msra.mxu0 0
      %2187 = vmatprep.subr.bf16.mxu0 %v2153
      %2188 = vmatpush1.bf16.msra.mxu0 %v2150
      %2189 = vmatprep.subr.bf16.mxu0 0
      %2190 = vmatpush2.bf16.msra.mxu0 0
      %2191 = vmatprep.subr.bf16.mxu0 0
      %2192 = vmatpush2.bf16.msra.mxu0 0
      %2193 = vmatprep.subr.bf16.mxu0 0
      %2194 = vmatpush2.bf16.msra.mxu0 0
      %2195 = vmatprep.subr.bf16.mxu0 0
      %2196 = vmatpush2.bf16.msra.mxu0 0
      %2197 = vmatprep.subr.bf16.mxu0 0
      %2198 = vmatpush2.bf16.msra.mxu0 0
      %2199 = vmatprep.subr.bf16.mxu0 0
      %2200 = vmatpush2.bf16.msra.mxu0 0
      %2201 = vmatprep.subr.bf16.mxu0 0
      %2202 = vmatpush2.bf16.msra.mxu0 0
      %2203 = vmatprep.subr.bf16.mxu0 0
      %2204 = vmatpush2.bf16.msra.mxu0 0
      %2205 = vmatprep.mubr.bf16.mxu0 0
      %2206 = vmatmul.mubr.bf16.gmra.mxu0 %v2147
      %v2207 = vpop.f32.mrf.mxu0
      %v2208 = vadd.f32 %v1990, %v2207
      %v2209 = vpop.f32.mrf.mxu0
      %v2210 = vadd.f32 %v1992, %v2209
      %v2211 = vpop.f32.mrf.mxu0
      %v2212 = vpop.f32.mrf.mxu0
      %2213 = vdwg.mxu0
      %2214 = vmatprep.subr.bf16.mxu0 0
      %2215 = vmatpush1.bf16.msra.mxu0 0
      %2216 = vmatprep.subr.bf16.mxu0 0
      %2217 = vmatpush1.bf16.msra.mxu0 0
      %2218 = vmatprep.subr.bf16.mxu0 0
      %2219 = vmatpush1.bf16.msra.mxu0 0
      %2220 = vmatprep.subr.bf16.mxu0 0
      %2221 = vmatpush1.bf16.msra.mxu0 0
      %2222 = vmatprep.subr.bf16.mxu0 0
      %2223 = vmatpush1.bf16.msra.mxu0 0
      %2224 = vmatprep.subr.bf16.mxu0 0
      %2225 = vmatpush1.bf16.msra.mxu0 0
      %2226 = vmatprep.subr.bf16.mxu0 0
      %2227 = vmatpush1.bf16.msra.mxu0 0
      %2228 = vmatprep.subr.bf16.mxu0 %v2159
      %2229 = vmatpush1.bf16.msra.mxu0 %v2156
      %2230 = vmatprep.subr.bf16.mxu0 0
      %2231 = vmatpush2.bf16.msra.mxu0 0
      %2232 = vmatprep.subr.bf16.mxu0 0
      %2233 = vmatpush2.bf16.msra.mxu0 0
      %2234 = vmatprep.subr.bf16.mxu0 0
      %2235 = vmatpush2.bf16.msra.mxu0 0
      %2236 = vmatprep.subr.bf16.mxu0 0
      %2237 = vmatpush2.bf16.msra.mxu0 0
      %2238 = vmatprep.subr.bf16.mxu0 0
      %2239 = vmatpush2.bf16.msra.mxu0 0
      %2240 = vmatprep.subr.bf16.mxu0 0
      %2241 = vmatpush2.bf16.msra.mxu0 0
      %2242 = vmatprep.subr.bf16.mxu0 0
      %2243 = vmatpush2.bf16.msra.mxu0 0
      %2244 = vmatprep.subr.bf16.mxu0 0
      %2245 = vmatpush2.bf16.msra.mxu0 0
      %2246 = vmatprep.mubr.bf16.mxu0 0
      %2247 = vmatmul.mubr.bf16.gmra.mxu0 %v2147
      %v2248 = vpop.f32.mrf.mxu0
      %v2249 = vadd.f32 %v2031, %v2248
      %v2250 = vpop.f32.mrf.mxu0
      %v2251 = vadd.f32 %v2033, %v2250
      %v2252 = vpop.f32.mrf.mxu0
      %v2253 = vpop.f32.mrf.mxu0
      %2254 = vdwg.mxu0
      %2255 = vmatprep.subr.bf16.mxu0 0
      %2256 = vmatpush1.bf16.msra.mxu0 0
      %2257 = vmatprep.subr.bf16.mxu0 0
      %2258 = vmatpush1.bf16.msra.mxu0 0
      %2259 = vmatprep.subr.bf16.mxu0 0
      %2260 = vmatpush1.bf16.msra.mxu0 0
      %2261 = vmatprep.subr.bf16.mxu0 0
      %2262 = vmatpush1.bf16.msra.mxu0 0
      %2263 = vmatprep.subr.bf16.mxu0 0
      %2264 = vmatpush1.bf16.msra.mxu0 0
      %2265 = vmatprep.subr.bf16.mxu0 0
      %2266 = vmatpush1.bf16.msra.mxu0 0
      %2267 = vmatprep.subr.bf16.mxu0 0
      %2268 = vmatpush1.bf16.msra.mxu0 0
      %2269 = vmatprep.subr.bf16.mxu0 %v2165
      %2270 = vmatpush1.bf16.msra.mxu0 %v2162
      %2271 = vmatprep.subr.bf16.mxu0 0
      %2272 = vmatpush2.bf16.msra.mxu0 0
      %2273 = vmatprep.subr.bf16.mxu0 0
      %2274 = vmatpush2.bf16.msra.mxu0 0
      %2275 = vmatprep.subr.bf16.mxu0 0
      %2276 = vmatpush2.bf16.msra.mxu0 0
      %2277 = vmatprep.subr.bf16.mxu0 0
      %2278 = vmatpush2.bf16.msra.mxu0 0
      %2279 = vmatprep.subr.bf16.mxu0 0
      %2280 = vmatpush2.bf16.msra.mxu0 0
      %2281 = vmatprep.subr.bf16.mxu0 0
      %2282 = vmatpush2.bf16.msra.mxu0 0
      %2283 = vmatprep.subr.bf16.mxu0 0
      %2284 = vmatpush2.bf16.msra.mxu0 0
      %2285 = vmatprep.subr.bf16.mxu0 0
      %2286 = vmatpush2.bf16.msra.mxu0 0
      %2287 = vmatprep.mubr.bf16.mxu0 0
      %2288 = vmatmul.mubr.bf16.gmra.mxu0 %v2147
      %v2289 = vpop.f32.mrf.mxu0
      %v2290 = vadd.f32 %v2072, %v2289
      %v2291 = vpop.f32.mrf.mxu0
      %v2292 = vadd.f32 %v2074, %v2291
      %v2293 = vpop.f32.mrf.mxu0
      %v2294 = vpop.f32.mrf.mxu0
      %2295 = vdwg.mxu0
      %2296 = vmatprep.subr.bf16.mxu0 0
      %2297 = vmatpush1.bf16.msra.mxu0 0
      %2298 = vmatprep.subr.bf16.mxu0 0
      %2299 = vmatpush1.bf16.msra.mxu0 0
      %2300 = vmatprep.subr.bf16.mxu0 0
      %2301 = vmatpush1.bf16.msra.mxu0 0
      %2302 = vmatprep.subr.bf16.mxu0 0
      %2303 = vmatpush1.bf16.msra.mxu0 0
      %2304 = vmatprep.subr.bf16.mxu0 0
      %2305 = vmatpush1.bf16.msra.mxu0 0
      %2306 = vmatprep.subr.bf16.mxu0 0
      %2307 = vmatpush1.bf16.msra.mxu0 0
      %2308 = vmatprep.subr.bf16.mxu0 0
      %2309 = vmatpush1.bf16.msra.mxu0 0
      %2310 = vmatprep.subr.bf16.mxu0 %v2171
      %2311 = vmatpush1.bf16.msra.mxu0 %v2168
      %2312 = vmatprep.subr.bf16.mxu0 0
      %2313 = vmatpush2.bf16.msra.mxu0 0
      %2314 = vmatprep.subr.bf16.mxu0 0
      %2315 = vmatpush2.bf16.msra.mxu0 0
      %2316 = vmatprep.subr.bf16.mxu0 0
      %2317 = vmatpush2.bf16.msra.mxu0 0
      %2318 = vmatprep.subr.bf16.mxu0 0
      %2319 = vmatpush2.bf16.msra.mxu0 0
      %2320 = vmatprep.subr.bf16.mxu0 0
      %2321 = vmatpush2.bf16.msra.mxu0 0
      %2322 = vmatprep.subr.bf16.mxu0 0
      %2323 = vmatpush2.bf16.msra.mxu0 0
      %2324 = vmatprep.subr.bf16.mxu0 0
      %2325 = vmatpush2.bf16.msra.mxu0 0
      %2326 = vmatprep.subr.bf16.mxu0 0
      %2327 = vmatpush2.bf16.msra.mxu0 0
      %2328 = vmatprep.mubr.bf16.mxu0 0
      %2329 = vmatmul.mubr.bf16.gmra.mxu0 %v2147
      %v2330 = vpop.f32.mrf.mxu0
      %v2331 = vadd.f32 %v2113, %v2330
      %v2332 = vpop.f32.mrf.mxu0
      %v2333 = vadd.f32 %v2115, %v2332
      %v2334 = vpop.f32.mrf.mxu0
      %v2335 = vpop.f32.mrf.mxu0
      %2336 = vdwg.mxu0
      %v2337 = vld [vmem:[%s165] sm:$0xff]
      %v2338 = vld [vmem:[%s165 + $0x8] sm:$0xff]
      %v2339 = vld [vmem:[%s165 + $0x10] sm:$0x3]
      %s2340 = scalar_lea.vmem %s1, 16
      %v2341 = vld [vmem:[%s2340] sm:$0x3]
      %v2345 = vcombine.high %v2337, %v2337
      %v2347 = vunpack.c.l.s4 1983009808
      %v2348 = vunpack.c.0.s8 %v2347
      %v2349 = vlaneseq
      %v2350 = vshrl.u32 %v2349, 7
      %v2351 = vsub.s32 %v2348, %v2350
      %v2352 = vrot.slane %v2337, %v2351
      %v2354 = vunpack.c.l.s4 1983009808
      %v2355 = vunpack.c.0.s8 %v2354
      %v2356 = vlaneseq
      %v2357 = vshrl.u32 %v2356, 7
      %v2358 = vsub.s32 %v2355, %v2357
      %v2359 = vrot.slane %v2345, %v2358
      %v2360 = vcombine.high %v2352, %v2352
      %v2361 = vcombine.high %v2359, %v2359
      %v2362 = vcombine.high %v2338, %v2338
      %v2364 = vunpack.c.l.s4 1983009808
      %v2365 = vunpack.c.0.s8 %v2364
      %v2366 = vlaneseq
      %v2367 = vshrl.u32 %v2366, 7
      %v2368 = vsub.s32 %v2365, %v2367
      %v2369 = vrot.slane %v2338, %v2368
      %v2371 = vunpack.c.l.s4 1983009808
      %v2372 = vunpack.c.0.s8 %v2371
      %v2373 = vlaneseq
      %v2374 = vshrl.u32 %v2373, 7
      %v2375 = vsub.s32 %v2372, %v2374
      %v2376 = vrot.slane %v2362, %v2375
      %v2377 = vcombine.high %v2369, %v2369
      %v2378 = vcombine.high %v2376, %v2376
      %v2380 = vunpack.c.l.s4 1983009808
      %v2381 = vunpack.c.0.s8 %v2380
      %v2382 = vlaneseq
      %v2383 = vshrl.u32 %v2382, 7
      %v2384 = vsub.s32 %v2381, %v2383
      %v2385 = vrot.slane %v2339, %v2384
      %2386 = vrot.lane.b32.xlu0 %v2352, 31
      %v2387 = vpop.permute.xlu0 %2386
      %2388 = vrot.lane.b32.xlu0 %v2360, 31
      %v2389 = vpop.permute.xlu0 %2388
      %2390 = vrot.lane.b32.xlu0 %v2359, 31
      %v2391 = vpop.permute.xlu0 %2390
      %2392 = vrot.lane.b32.xlu0 %v2361, 31
      %v2393 = vpop.permute.xlu0 %2392
      %2394 = vrot.lane.b32.xlu0 %v2369, 31
      %v2395 = vpop.permute.xlu0 %2394
      %2396 = vrot.lane.b32.xlu0 %v2377, 31
      %v2397 = vpop.permute.xlu0 %2396
      %2398 = vrot.lane.b32.xlu0 %v2376, 31
      %v2399 = vpop.permute.xlu0 %2398
      %2400 = vrot.lane.b32.xlu0 %v2378, 31
      %v2401 = vpop.permute.xlu0 %2400
      %2402 = vrot.lane.b32.xlu0 %v2385, 31
      %v2403 = vpop.permute.xlu0 %2402
      %vm2404 = vcmask 252928
      %v2405 = vsel %vm2404, %v2387, %v2389
      %v2406 = vsel %vm2404, %v2389, %v2391
      %v2407 = vsel %vm2404, %v2391, %v2393
      %v2408 = vsel %vm2404, %v2393, %v2395
      %v2409 = vsel %vm2404, %v2395, %v2397
      %v2410 = vsel %vm2404, %v2397, %v2399
      %v2411 = vsel %vm2404, %v2399, %v2401
      %v2412 = vsel %vm2404, %v2401, %v2403
      %v2414 = vsel %vm354, %v2341, 0
      %v2417 = vsel %vm358, %v2405, 0
      %v2420 = vsel %vm358, %v2406, 0
      %v2423 = vsel %vm358, %v2407, 0
      %v2426 = vsel %vm358, %v2408, 0
      %v2429 = vsel %vm358, %v2409, 0
      %v2432 = vsel %vm358, %v2410, 0
      %v2435 = vsel %vm358, %v2411, 0
      %v2438 = vsel %vm358, %v2412, 0
      %2440 = vmatprep.subr.bf16.mxu0 0
      %2441 = vmatpush1.bf16.msra.mxu0 0
      %2442 = vmatprep.subr.bf16.mxu0 0
      %2443 = vmatpush1.bf16.msra.mxu0 0
      %2444 = vmatprep.subr.bf16.mxu0 0
      %2445 = vmatpush1.bf16.msra.mxu0 0
      %2446 = vmatprep.subr.bf16.mxu0 0
      %2447 = vmatpush1.bf16.msra.mxu0 0
      %2448 = vmatprep.subr.bf16.mxu0 0
      %2449 = vmatpush1.bf16.msra.mxu0 0
      %2450 = vmatprep.subr.bf16.mxu0 0
      %2451 = vmatpush1.bf16.msra.mxu0 0
      %2452 = vmatprep.subr.bf16.mxu0 0
      %2453 = vmatpush1.bf16.msra.mxu0 0
      %2454 = vmatprep.subr.bf16.mxu0 %v2420
      %2455 = vmatpush1.bf16.msra.mxu0 %v2417
      %2456 = vmatprep.subr.bf16.mxu0 0
      %2457 = vmatpush2.bf16.msra.mxu0 0
      %2458 = vmatprep.subr.bf16.mxu0 0
      %2459 = vmatpush2.bf16.msra.mxu0 0
      %2460 = vmatprep.subr.bf16.mxu0 0
      %2461 = vmatpush2.bf16.msra.mxu0 0
      %2462 = vmatprep.subr.bf16.mxu0 0
      %2463 = vmatpush2.bf16.msra.mxu0 0
      %2464 = vmatprep.subr.bf16.mxu0 0
      %2465 = vmatpush2.bf16.msra.mxu0 0
      %2466 = vmatprep.subr.bf16.mxu0 0
      %2467 = vmatpush2.bf16.msra.mxu0 0
      %2468 = vmatprep.subr.bf16.mxu0 0
      %2469 = vmatpush2.bf16.msra.mxu0 0
      %2470 = vmatprep.subr.bf16.mxu0 0
      %2471 = vmatpush2.bf16.msra.mxu0 0
      %2472 = vmatprep.mubr.bf16.mxu0 0
      %2473 = vmatmul.mubr.bf16.gmra.mxu0 %v2414
      %v2474 = vpop.f32.mrf.mxu0
      %v2475 = vadd.f32 0.0, %v2474
      %v2476 = vpop.f32.mrf.mxu0
      %v2477 = vadd.f32 0.0, %v2476
      %v2478 = vpop.f32.mrf.mxu0
      %v2479 = vpop.f32.mrf.mxu0
      %2480 = vdwg.mxu0
      %2481 = vmatprep.subr.bf16.mxu0 0
      %2482 = vmatpush1.bf16.msra.mxu0 0
      %2483 = vmatprep.subr.bf16.mxu0 0
      %2484 = vmatpush1.bf16.msra.mxu0 0
      %2485 = vmatprep.subr.bf16.mxu0 0
      %2486 = vmatpush1.bf16.msra.mxu0 0
      %2487 = vmatprep.subr.bf16.mxu0 0
      %2488 = vmatpush1.bf16.msra.mxu0 0
      %2489 = vmatprep.subr.bf16.mxu0 0
      %2490 = vmatpush1.bf16.msra.mxu0 0
      %2491 = vmatprep.subr.bf16.mxu0 0
      %2492 = vmatpush1.bf16.msra.mxu0 0
      %2493 = vmatprep.subr.bf16.mxu0 0
      %2494 = vmatpush1.bf16.msra.mxu0 0
      %2495 = vmatprep.subr.bf16.mxu0 %v2426
      %2496 = vmatpush1.bf16.msra.mxu0 %v2423
      %2497 = vmatprep.subr.bf16.mxu0 0
      %2498 = vmatpush2.bf16.msra.mxu0 0
      %2499 = vmatprep.subr.bf16.mxu0 0
      %2500 = vmatpush2.bf16.msra.mxu0 0
      %2501 = vmatprep.subr.bf16.mxu0 0
      %2502 = vmatpush2.bf16.msra.mxu0 0
      %2503 = vmatprep.subr.bf16.mxu0 0
      %2504 = vmatpush2.bf16.msra.mxu0 0
      %2505 = vmatprep.subr.bf16.mxu0 0
      %2506 = vmatpush2.bf16.msra.mxu0 0
      %2507 = vmatprep.subr.bf16.mxu0 0
      %2508 = vmatpush2.bf16.msra.mxu0 0
      %2509 = vmatprep.subr.bf16.mxu0 0
      %2510 = vmatpush2.bf16.msra.mxu0 0
      %2511 = vmatprep.subr.bf16.mxu0 0
      %2512 = vmatpush2.bf16.msra.mxu0 0
      %2513 = vmatprep.mubr.bf16.mxu0 0
      %2514 = vmatmul.mubr.bf16.gmra.mxu0 %v2414
      %v2515 = vpop.f32.mrf.mxu0
      %v2516 = vadd.f32 0.0, %v2515
      %v2517 = vpop.f32.mrf.mxu0
      %v2518 = vadd.f32 0.0, %v2517
      %v2519 = vpop.f32.mrf.mxu0
      %v2520 = vpop.f32.mrf.mxu0
      %2521 = vdwg.mxu0
      %2522 = vmatprep.subr.bf16.mxu0 0
      %2523 = vmatpush1.bf16.msra.mxu0 0
      %2524 = vmatprep.subr.bf16.mxu0 0
      %2525 = vmatpush1.bf16.msra.mxu0 0
      %2526 = vmatprep.subr.bf16.mxu0 0
      %2527 = vmatpush1.bf16.msra.mxu0 0
      %2528 = vmatprep.subr.bf16.mxu0 0
      %2529 = vmatpush1.bf16.msra.mxu0 0
      %2530 = vmatprep.subr.bf16.mxu0 0
      %2531 = vmatpush1.bf16.msra.mxu0 0
      %2532 = vmatprep.subr.bf16.mxu0 0
      %2533 = vmatpush1.bf16.msra.mxu0 0
      %2534 = vmatprep.subr.bf16.mxu0 0
      %2535 = vmatpush1.bf16.msra.mxu0 0
      %2536 = vmatprep.subr.bf16.mxu0 %v2432
      %2537 = vmatpush1.bf16.msra.mxu0 %v2429
      %2538 = vmatprep.subr.bf16.mxu0 0
      %2539 = vmatpush2.bf16.msra.mxu0 0
      %2540 = vmatprep.subr.bf16.mxu0 0
      %2541 = vmatpush2.bf16.msra.mxu0 0
      %2542 = vmatprep.subr.bf16.mxu0 0
      %2543 = vmatpush2.bf16.msra.mxu0 0
      %2544 = vmatprep.subr.bf16.mxu0 0
      %2545 = vmatpush2.bf16.msra.mxu0 0
      %2546 = vmatprep.subr.bf16.mxu0 0
      %2547 = vmatpush2.bf16.msra.mxu0 0
      %2548 = vmatprep.subr.bf16.mxu0 0
      %2549 = vmatpush2.bf16.msra.mxu0 0
      %2550 = vmatprep.subr.bf16.mxu0 0
      %2551 = vmatpush2.bf16.msra.mxu0 0
      %2552 = vmatprep.subr.bf16.mxu0 0
      %2553 = vmatpush2.bf16.msra.mxu0 0
      %2554 = vmatprep.mubr.bf16.mxu0 0
      %2555 = vmatmul.mubr.bf16.gmra.mxu0 %v2414
      %v2556 = vpop.f32.mrf.mxu0
      %v2557 = vadd.f32 0.0, %v2556
      %v2558 = vpop.f32.mrf.mxu0
      %v2559 = vadd.f32 0.0, %v2558
      %v2560 = vpop.f32.mrf.mxu0
      %v2561 = vpop.f32.mrf.mxu0
      %2562 = vdwg.mxu0
      %2563 = vmatprep.subr.bf16.mxu0 0
      %2564 = vmatpush1.bf16.msra.mxu0 0
      %2565 = vmatprep.subr.bf16.mxu0 0
      %2566 = vmatpush1.bf16.msra.mxu0 0
      %2567 = vmatprep.subr.bf16.mxu0 0
      %2568 = vmatpush1.bf16.msra.mxu0 0
      %2569 = vmatprep.subr.bf16.mxu0 0
      %2570 = vmatpush1.bf16.msra.mxu0 0
      %2571 = vmatprep.subr.bf16.mxu0 0
      %2572 = vmatpush1.bf16.msra.mxu0 0
      %2573 = vmatprep.subr.bf16.mxu0 0
      %2574 = vmatpush1.bf16.msra.mxu0 0
      %2575 = vmatprep.subr.bf16.mxu0 0
      %2576 = vmatpush1.bf16.msra.mxu0 0
      %2577 = vmatprep.subr.bf16.mxu0 %v2438
      %2578 = vmatpush1.bf16.msra.mxu0 %v2435
      %2579 = vmatprep.subr.bf16.mxu0 0
      %2580 = vmatpush2.bf16.msra.mxu0 0
      %2581 = vmatprep.subr.bf16.mxu0 0
      %2582 = vmatpush2.bf16.msra.mxu0 0
      %2583 = vmatprep.subr.bf16.mxu0 0
      %2584 = vmatpush2.bf16.msra.mxu0 0
      %2585 = vmatprep.subr.bf16.mxu0 0
      %2586 = vmatpush2.bf16.msra.mxu0 0
      %2587 = vmatprep.subr.bf16.mxu0 0
      %2588 = vmatpush2.bf16.msra.mxu0 0
      %2589 = vmatprep.subr.bf16.mxu0 0
      %2590 = vmatpush2.bf16.msra.mxu0 0
      %2591 = vmatprep.subr.bf16.mxu0 0
      %2592 = vmatpush2.bf16.msra.mxu0 0
      %2593 = vmatprep.subr.bf16.mxu0 0
      %2594 = vmatpush2.bf16.msra.mxu0 0
      %2595 = vmatprep.mubr.bf16.mxu0 0
      %2596 = vmatmul.mubr.bf16.gmra.mxu0 %v2414
      %v2597 = vpop.f32.mrf.mxu0
      %v2598 = vadd.f32 0.0, %v2597
      %v2599 = vpop.f32.mrf.mxu0
      %v2600 = vadd.f32 0.0, %v2599
      %v2601 = vpop.f32.mrf.mxu0
      %v2602 = vpop.f32.mrf.mxu0
      %2603 = vdwg.mxu0
      %v2604 = vadd.f32 %v2208, %v2475
      %v2605 = vadd.f32 %v2210, %v2477
      %v2606 = vadd.f32 %v2249, %v2516
      %v2607 = vadd.f32 %v2251, %v2518
      %v2608 = vadd.f32 %v2290, %v2557
      %v2609 = vadd.f32 %v2292, %v2559
      %v2610 = vadd.f32 %v2331, %v2598
      %v2611 = vadd.f32 %v2333, %v2600
      %vm2612 = vcmp.lt.s32.totalorder %v269, 31
      %vm2613 = vcmp.lt.s32.totalorder %v270, 31
      %vm2614 = vcmp.lt.s32.totalorder %v271, 31
      %vm2615 = vcmp.lt.s32.totalorder %v272, 31
      %vm2616 = vcmp.lt.s32.totalorder %v273, 31
      %vm2617 = vcmp.lt.s32.totalorder %v274, 31
      %vm2618 = vcmp.lt.s32.totalorder %v275, 31
      %vm2619 = vcmp.lt.s32.totalorder %v276, 31
      %v2620 = vsel %vm2612, 1, 0
      %v2621 = vsel %vm2613, 1, 0
      %v2622 = vsel %vm2614, 1, 0
      %v2623 = vsel %vm2615, 1, 0
      %v2624 = vsel %vm2616, 1, 0
      %v2625 = vsel %vm2617, 1, 0
      %v2626 = vsel %vm2618, 1, 0
      %v2627 = vsel %vm2619, 1, 0
      %vm2628 = vcmp.eq.s32.totalorder %v2620, 1
      %vm2629 = vcmp.eq.s32.totalorder %v2621, 1
      %vm2630 = vcmp.eq.s32.totalorder %v2622, 1
      %vm2631 = vcmp.eq.s32.totalorder %v2623, 1
      %vm2632 = vcmp.eq.s32.totalorder %v2624, 1
      %vm2633 = vcmp.eq.s32.totalorder %v2625, 1
      %vm2634 = vcmp.eq.s32.totalorder %v2626, 1
      %vm2635 = vcmp.eq.s32.totalorder %v2627, 1
      %v2636 = vsel %vm2628, %v2604, 0.0
      %v2637 = vsel %vm2629, %v2605, 0.0
      %v2638 = vsel %vm2630, %v2606, 0.0
      %v2639 = vsel %vm2631, %v2607, 0.0
      %v2640 = vsel %vm2632, %v2608, 0.0
      %v2641 = vsel %vm2633, %v2609, 0.0
      %v2642 = vsel %vm2634, %v2610, 0.0
      %v2643 = vsel %vm2635, %v2611, 0.0
      %v2644 = vadd.f32 %v1842, %v2636
      %v2645 = vadd.f32 %v1843, %v2637
      %v2646 = vadd.f32 %v1844, %v2638
      %v2647 = vadd.f32 %v1845, %v2639
      %v2648 = vadd.f32 %v1846, %v2640
      %v2649 = vadd.f32 %v1847, %v2641
      %v2650 = vadd.f32 %v1848, %v2642
      %v2651 = vadd.f32 %v1849, %v2643
      %v2652 = vld [vmem:[%s2] sm:$0xf]
      %2654 = vset.pattern.permute.xlu0 0
      %2655 = vperm.xlu0 %2654, %v2652
      %v2656 = vpop.permute.xlu0 %2655
      %v2658 = vadd.f32 %v2644, %v2656
      %v2659 = vadd.f32 %v2645, %v2656
      %v2660 = vadd.f32 %v2646, %v2656
      %v2661 = vadd.f32 %v2647, %v2656
      %v2662 = vadd.f32 %v2648, %v2656
      %v2663 = vadd.f32 %v2649, %v2656
      %v2664 = vadd.f32 %v2650, %v2656
      %v2665 = vadd.f32 %v2651, %v2656
      %v2674 = vcombine.low %v2658, %v2659
      %v2675 = vcombine.low %v2660, %v2661
      %v2676 = vcombine.low %v2662, %v2663
      %v2677 = vcombine.low %v2664, %v2665
      %2682 = vst [vmem:[%s170] sm:$0xff] %v2674
      %2683 = vst [vmem:[%s170 + $0x8] sm:$0xff] %v2675
      %2684 = vst [vmem:[%s170 + $0x10] sm:$0xff] %v2676
      %2685 = vst [vmem:[%s170 + $0x18] sm:$0xff] %v2677
      %p2686 = scmp.lt.s32.totalorder %s14, 1
      %s2687 = scalar_select %p2686, %s14, 1
      %s2688 = smul.addr %s2687, 8
      %s2689 = smul.addr %s2688, 4
      %s2690 = scalar_lea.vmem %s3, %s2689
      // Predicated region
      $region33: #{decoder_map_forward.1} parent=31 // pred_check
        %p2691 = pneg %p100
      $region34: #{decoder_map_forward.1} parent=31 // pred_check_branch
        %2693 = sbr.rel (%p2691) target = $region36
      $region35: #{decoder_map_forward.1} parent=31 // pred_region
        _
      $region36: #{decoder_map_forward.1} parent=31 // pred_fallthru
        _
    $region32: #{decoder_map_forward.1} parent=5 // pred_fallthru
      _
    %p2694 = scmp.le.s32.totalorder 2, %s9
    // Predicated region
    $region37: #{decoder_map_forward.1} parent=5 // pred_check
      %p2695 = pneg %p2694
    $region38: #{decoder_map_forward.1} parent=5 // pred_check_branch
      %2697 = sbr.rel (%p2695) target = $region40
    $region39: #{decoder_map_forward.1} parent=5 // pred_region
      %s2698 = ssub.s32 %s9, 2
      // Predicated region
      $region41: #{decoder_map_forward.1} parent=39 // pred_check
        %p2699 = pneg %p106
      $region42: #{decoder_map_forward.1} parent=39 // pred_check_branch
        %2701 = sbr.rel (%p2699) target = $region44
      $region43: #{decoder_map_forward.1} parent=39 // pred_region
        %p2702 = scmp.lt.s32.totalorder %s15, 1
        %s2703 = scalar_select %p2702, %s15, 1
        %s2704 = smul.addr %s2703, 8
        %s2705 = smul.addr %s2704, 4
        %s2706 = scalar_lea.vmem %s3, %s2705
      $region44: #{decoder_map_forward.1} parent=39 // pred_fallthru
        _
    $region40: #{decoder_map_forward.1} parent=5 // pred_fallthru
      _
  $region6: #{decoder_map_forward.1} parent=0 // loop_footer
    %s13 = sadd.s32 1, %s9
  $region7: #{decoder_map_forward.1} parent=0 // loop_footer_branch
    %8 = sbr.rel target = $region3
  $region8: #{decoder_map_forward.1} parent=0 // loop_exit
    _

</llo_original>
